<compile_context>
chip_gen: v5e
topology: v5e:2x2
jax: 0.10.0
libtpu: 0.0.40
codegen_flags: <defaults>
</compile_context>

<pallas_src>
import functools
import math

import jax
import jax.numpy as jnp
from jax.experimental import pallas as pl
from jax.experimental.pallas import tpu as pltpu


def _attention_kernel(x_ref, wqkv_ref, bias_ref, g1_ref, b1_ref, g2_ref, b2_ref,
                      o_ref, *, num_heads, scale, add_norm, eps):
    """Fused attention block for one batch slab of shape (S, E)."""
    x = x_ref[0].astype(jnp.float32)                       # (S, E)
    S, E = x.shape
    dh = E // num_heads

    # --- fused Q/K/V projection: one MXU matmul, bf16 operands, f32 accumulate ---
    qkv = jnp.dot(x.astype(jnp.bfloat16),
                  wqkv_ref[...].astype(jnp.bfloat16),
                  preferred_element_type=jnp.float32)      # (S, 3E)
    q = qkv[:, 0 * E:1 * E]
    k = qkv[:, 1 * E:2 * E]
    v = qkv[:, 2 * E:3 * E]

    # --- per-head attention (static, unrolled loop; static lane slices) ---
    head_outs = []
    for h in range(num_heads):
        sl = slice(h * dh, (h + 1) * dh)
        qh = q[:, sl].astype(jnp.bfloat16)                 # (S, dh)
        kh = k[:, sl].astype(jnp.bfloat16)                 # (S, dh)
        vh = v[:, sl].astype(jnp.bfloat16)                 # (S, dh)

        # logits = q @ k^T * scale  (contract last dims; no explicit transpose)
        logits = jax.lax.dot_general(
            qh, kh, (((1,), (1,)), ((), ())),
            preferred_element_type=jnp.float32) * scale    # (S, S)

        # numerically stable softmax in f32
        logits = logits - jnp.max(logits, axis=-1, keepdims=True)
        p = jnp.exp(logits)
        attn = p / jnp.sum(p, axis=-1, keepdims=True)

        # relative position bias is added AFTER the softmax (as in the module)
        attn = attn + bias_ref[h]                          # (S, S)

        oh = jnp.dot(attn.astype(jnp.bfloat16), vh,
                     preferred_element_type=jnp.float32)   # (S, dh)
        head_outs.append(oh)

    out = jnp.concatenate(head_outs, axis=-1)              # (S, E), head-major channels

    # --- to_out LayerNorm (f32) ---
    mean = jnp.mean(out, axis=-1, keepdims=True)
    var = jnp.mean((out - mean) ** 2, axis=-1, keepdims=True)
    out = (out - mean) * jax.lax.rsqrt(var + eps) * g1_ref[...] + b1_ref[...]

    # --- optional residual LayerNorm ---
    if add_norm:
        z = x + out
        mean = jnp.mean(z, axis=-1, keepdims=True)
        var = jnp.mean((z - mean) ** 2, axis=-1, keepdims=True)
        out = (z - mean) * jax.lax.rsqrt(var + eps) * g2_ref[...] + b2_ref[...]

    o_ref[0] = out.astype(o_ref.dtype)


def attention(x, params, *, num_heads, seq_len, add_norm=True, eps=1e-5,
              vmem_limit_bytes=None):
    """x: (B, S, E) float32. params: wq/wk/wv (E,E in->out), bias table+index, LN params."""
    B, S, E = x.shape
    assert S == seq_len, "input seq_len must match the module's positional table"
    assert E % num_heads == 0

    scale = float(E) ** (-0.5)           # module uses emb_size ** -0.5 (not head dim)

    # Fused QKV weight, stored (in, out) so the kernel computes x @ W (== x @ W_torch.T).
    wqkv = jnp.concatenate([params["wq"], params["wk"], params["wv"]], axis=1)  # (E, 3E)

    # Expand the relative-position table into a dense (H, S, S) bias.  This is pure
    # index plumbing (same gather + rearrange the module does each forward).
    rel = jnp.take(params["relative_bias_table"], params["relative_index"], axis=0)  # (S*S, H)
    bias = rel.T.reshape(num_heads, S, S).astype(jnp.float32)                        # (H, S, S)

    kernel = functools.partial(
        _attention_kernel, num_heads=num_heads, scale=scale,
        add_norm=bool(add_norm), eps=float(eps))

    rows = lambda b: (b, 0, 0)           # per-batch slab
    full2 = lambda b: (0, 0)             # whole 2-D array (weights / LN params)
    full3 = lambda b: (0, 0, 0)          # whole 3-D array (bias)

    out = pl.pallas_call(
        kernel,
        out_shape=jax.ShapeDtypeStruct((B, S, E), x.dtype),
        grid_spec=pltpu.PrefetchScalarGridSpec(
            num_scalar_prefetch=0,
            grid=(B,),
            in_specs=[
                pl.BlockSpec((1, S, E), rows),            # x slab
                pl.BlockSpec((E, 3 * E), full2),          # fused Wqkv (VMEM-resident)
                pl.BlockSpec((num_heads, S, S), full3),   # relative bias
                pl.BlockSpec((1, E), full2),              # to_out gamma
                pl.BlockSpec((1, E), full2),              # to_out beta
                pl.BlockSpec((1, E), full2),              # final LN gamma
                pl.BlockSpec((1, E), full2),              # final LN beta
            ],
            out_specs=pl.BlockSpec((1, S, E), rows),
        ),
        compiler_params=pltpu.CompilerParams(
            dimension_semantics=("parallel",),            # shard batch across TCs (v7x)
            vmem_limit_bytes=vmem_limit_bytes),
    )(x, wqkv, bias, params["g1"], params["b1"], params["g2"], params["b2"])
    return out


def init_params(key, emb_size, num_heads, seq_len):
    """nn.Linear-style init (U(-1/sqrt(fan_in), 1/sqrt(fan_in)), no bias)."""
    kq, kk, kv, kb = jax.random.split(key, 4)
    bound = 1.0 / math.sqrt(emb_size)
    # relative_index[i*S + j] = i - j + (S - 1), identical to the module's buffer
    i = jnp.arange(seq_len)[:, None]
    j = jnp.arange(seq_len)[None, :]
    rel_index = (i - j + seq_len - 1).reshape(-1).astype(jnp.int32)
    return {
        "wq": jax.random.uniform(kq, (emb_size, emb_size), jnp.float32, -bound, bound),
        "wk": jax.random.uniform(kk, (emb_size, emb_size), jnp.float32, -bound, bound),
        "wv": jax.random.uniform(kv, (emb_size, emb_size), jnp.float32, -bound, bound),
        # module initializes the table to zeros; use small random values so the
        # bias path is actually exercised by the self-check
        "relative_bias_table": 0.02 * jax.random.normal(
            kb, (2 * seq_len - 1, num_heads), jnp.float32),
        "relative_index": rel_index,
        "g1": jnp.ones((1, emb_size), jnp.float32),   # to_out LayerNorm affine
        "b1": jnp.zeros((1, emb_size), jnp.float32),
        "g2": jnp.ones((1, emb_size), jnp.float32),   # final LayerNorm affine
        "b2": jnp.zeros((1, emb_size), jnp.float32),
    }


def _reference(x, params, *, num_heads, add_norm=True, eps=1e-5):
    """Pure-JAX f32 reference matching the PyTorch forward."""
    B, S, E = x.shape
    dh = E // num_heads
    scale = float(E) ** (-0.5)
    q = (x @ params["wq"]).reshape(B, S, num_heads, dh).transpose(0, 2, 1, 3)
    k = (x @ params["wk"]).reshape(B, S, num_heads, dh).transpose(0, 2, 1, 3)
    v = (x @ params["wv"]).reshape(B, S, num_heads, dh).transpose(0, 2, 1, 3)
    attn = jnp.einsum("bhqd,bhkd->bhqk", q, k) * scale
    attn = jax.nn.softmax(attn, axis=-1)
    rel = jnp.take(params["relative_bias_table"], params["relative_index"], axis=0)
    attn = attn + rel.T.reshape(1, num_heads, S, S)
    out = jnp.einsum("bhqk,bhkd->bhqd", attn, v)
    out = out.transpose(0, 2, 1, 3).reshape(B, S, E)

    def ln(z, g, b):
        m = jnp.mean(z, -1, keepdims=True)
        s2 = jnp.mean((z - m) ** 2, -1, keepdims=True)
        return (z - m) / jnp.sqrt(s2 + eps) * g[0] + b[0]

    out = ln(out, params["g1"], params["b1"])
    if add_norm:
        out = ln(x + out, params["g2"], params["b2"])
    return out


if __name__ == "__main__":
    # Small but lane-dense shapes: E = 128 (multiple of 128), 8 heads of dim 16.
    B, S, E, H = 2, 16, 128, 8
    key = jax.random.PRNGKey(0)
    kx, kp = jax.random.split(key)
    x = jax.random.normal(kx, (B, S, E), jnp.float32)
    params = init_params(kp, E, H, S)

    out = attention(x, params, num_heads=H, seq_len=S, add_norm=True)
    out = jax.block_until_ready(out)

    ref = _reference(x, params, num_heads=H, add_norm=True)
    assert out.shape == (B, S, E)
    max_err = float(jnp.max(jnp.abs(out - ref)))
    # bf16 MXU operands (f32 accumulate) -> allow small absolute error on O(1) LN output
    assert max_err < 5e-2, f"max abs error {max_err}"

    print("KERNEL_OK")
</pallas_src>

<mosaic_0001>
module attributes {stable_mosaic.version = 11 : i64} {
  func.func @_attention_kernel(%arg0: i32, %arg1: memref<1x16x128xf32, #tpu.memory_space<vmem>>, %arg2: memref<128x384xf32, #tpu.memory_space<vmem>>, %arg3: memref<8x16x16xf32, #tpu.memory_space<vmem>>, %arg4: memref<1x128xf32, #tpu.memory_space<vmem>>, %arg5: memref<1x128xf32, #tpu.memory_space<vmem>>, %arg6: memref<1x128xf32, #tpu.memory_space<vmem>>, %arg7: memref<1x128xf32, #tpu.memory_space<vmem>>, %arg8: memref<1x16x128xf32, #tpu.memory_space<vmem>>) attributes {dimension_semantics = [#tpu.dimension_semantics<parallel>], iteration_bounds = array<i64: 2>, scalar_prefetch = 0 : i64, scratch_operands = 0 : i64, tpu.core_type = #tpu.core_type<tc>, window_params = [{transform_indices = @transform_0, window_bounds = array<i64: 1, 16, 128>}, {pipeline_mode = #tpu.pipeline_mode<synchronous>, transform_indices = @transform_1, window_bounds = array<i64: 128, 384>}, {pipeline_mode = #tpu.pipeline_mode<synchronous>, transform_indices = @transform_2, window_bounds = array<i64: 8, 16, 16>}, {pipeline_mode = #tpu.pipeline_mode<synchronous>, transform_indices = @transform_3, window_bounds = array<i64: 1, 128>}, {pipeline_mode = #tpu.pipeline_mode<synchronous>, transform_indices = @transform_4, window_bounds = array<i64: 1, 128>}, {pipeline_mode = #tpu.pipeline_mode<synchronous>, transform_indices = @transform_5, window_bounds = array<i64: 1, 128>}, {pipeline_mode = #tpu.pipeline_mode<synchronous>, transform_indices = @transform_6, window_bounds = array<i64: 1, 128>}, {transform_indices = @transform_7, window_bounds = array<i64: 1, 16, 128>}]} {
    %c0 = arith.constant 0 : index
    %c0_0 = arith.constant 0 : index
    %c0_1 = arith.constant 0 : index
    %0 = vector.load %arg1[%c0, %c0_0, %c0_1] : memref<1x16x128xf32, #tpu.memory_space<vmem>>, vector<1x16x128xf32>
    %1 = vector.shape_cast %0 : vector<1x16x128xf32> to vector<16x128xf32>
    %2 = arith.truncf %1 : vector<16x128xf32> to vector<16x128xbf16>
    %c0_2 = arith.constant 0 : index
    %c0_3 = arith.constant 0 : index
    %3 = vector.load %arg2[%c0_2, %c0_3] : memref<128x384xf32, #tpu.memory_space<vmem>>, vector<128x384xf32>
    %4 = arith.truncf %3 : vector<128x384xf32> to vector<128x384xbf16>
    %cst = arith.constant dense<0.000000e+00> : vector<16x384xf32>
    %5 = tpu.matmul %2, %4, %cst {dimension_numbers = #tpu.dot_dimension_numbers<[1], [0], [0], [1], [0, 0, 1, 1], [], []>} : vector<16x128xbf16>, vector<128x384xbf16>, vector<16x384xf32> -> vector<16x384xf32>
    %6 = vector.extract_strided_slice %5 {offsets = [0, 0], sizes = [16, 128], strides = [1, 1]} : vector<16x384xf32> to vector<16x128xf32>
    %7 = vector.extract_strided_slice %5 {offsets = [0, 128], sizes = [16, 128], strides = [1, 1]} : vector<16x384xf32> to vector<16x128xf32>
    %8 = vector.extract_strided_slice %5 {offsets = [0, 256], sizes = [16, 128], strides = [1, 1]} : vector<16x384xf32> to vector<16x128xf32>
    %9 = vector.extract_strided_slice %6 {offsets = [0, 0], sizes = [16, 16], strides = [1, 1]} : vector<16x128xf32> to vector<16x16xf32>
    %10 = arith.truncf %9 : vector<16x16xf32> to vector<16x16xbf16>
    %11 = vector.extract_strided_slice %7 {offsets = [0, 0], sizes = [16, 16], strides = [1, 1]} : vector<16x128xf32> to vector<16x16xf32>
    %12 = arith.truncf %11 : vector<16x16xf32> to vector<16x16xbf16>
    %13 = vector.extract_strided_slice %8 {offsets = [0, 0], sizes = [16, 16], strides = [1, 1]} : vector<16x128xf32> to vector<16x16xf32>
    %14 = arith.truncf %13 : vector<16x16xf32> to vector<16x16xbf16>
    %cst_4 = arith.constant dense<0.000000e+00> : vector<16x16xf32>
    %15 = tpu.matmul %10, %12, %cst_4 {dimension_numbers = #tpu.dot_dimension_numbers<[1], [1], [0], [0], [0, 0, 1, 0], [], []>} : vector<16x16xbf16>, vector<16x16xbf16>, vector<16x16xf32> -> vector<16x16xf32>
    %cst_5 = arith.constant 0.0883883461 : f32
    %16 = vector.broadcast %cst_5 : f32 to vector<16x16xf32>
    %17 = arith.mulf %15, %16 : vector<16x16xf32>
    %cst_6 = arith.constant dense<0xFF800000> : vector<16xf32>
    %18 = vector.multi_reduction <maximumf>, %17, %cst_6 [1] : vector<16x16xf32> to vector<16xf32>
    %19 = vector.shape_cast %18 : vector<16xf32> to vector<16x1xf32>
    %20 = vector.broadcast %19 : vector<16x1xf32> to vector<16x16xf32>
    %21 = arith.subf %17, %20 : vector<16x16xf32>
    %22 = math.exp %21 : vector<16x16xf32>
    %cst_7 = arith.constant dense<0.000000e+00> : vector<16xf32>
    %23 = vector.multi_reduction <add>, %22, %cst_7 [1] : vector<16x16xf32> to vector<16xf32>
    %24 = vector.shape_cast %23 : vector<16xf32> to vector<16x1xf32>
    %25 = vector.broadcast %24 : vector<16x1xf32> to vector<16x16xf32>
    %26 = arith.divf %22, %25 : vector<16x16xf32>
    %c0_8 = arith.constant 0 : index
    %c0_9 = arith.constant 0 : index
    %c0_10 = arith.constant 0 : index
    %27 = vector.load %arg3[%c0_8, %c0_9, %c0_10] : memref<8x16x16xf32, #tpu.memory_space<vmem>>, vector<1x16x16xf32>
    %28 = vector.shape_cast %27 : vector<1x16x16xf32> to vector<16x16xf32>
    %29 = arith.addf %26, %28 : vector<16x16xf32>
    %30 = arith.truncf %29 : vector<16x16xf32> to vector<16x16xbf16>
    %cst_11 = arith.constant dense<0.000000e+00> : vector<16x16xf32>
    %31 = tpu.matmul %30, %14, %cst_11 {dimension_numbers = #tpu.dot_dimension_numbers<[1], [0], [0], [1], [0, 0, 1, 1], [], []>} : vector<16x16xbf16>, vector<16x16xbf16>, vector<16x16xf32> -> vector<16x16xf32>
    %32 = vector.extract_strided_slice %6 {offsets = [0, 16], sizes = [16, 16], strides = [1, 1]} : vector<16x128xf32> to vector<16x16xf32>
    %33 = arith.truncf %32 : vector<16x16xf32> to vector<16x16xbf16>
    %34 = vector.extract_strided_slice %7 {offsets = [0, 16], sizes = [16, 16], strides = [1, 1]} : vector<16x128xf32> to vector<16x16xf32>
    %35 = arith.truncf %34 : vector<16x16xf32> to vector<16x16xbf16>
    %36 = vector.extract_strided_slice %8 {offsets = [0, 16], sizes = [16, 16], strides = [1, 1]} : vector<16x128xf32> to vector<16x16xf32>
    %37 = arith.truncf %36 : vector<16x16xf32> to vector<16x16xbf16>
    %cst_12 = arith.constant dense<0.000000e+00> : vector<16x16xf32>
    %38 = tpu.matmul %33, %35, %cst_12 {dimension_numbers = #tpu.dot_dimension_numbers<[1], [1], [0], [0], [0, 0, 1, 0], [], []>} : vector<16x16xbf16>, vector<16x16xbf16>, vector<16x16xf32> -> vector<16x16xf32>
    %cst_13 = arith.constant 0.0883883461 : f32
    %39 = vector.broadcast %cst_13 : f32 to vector<16x16xf32>
    %40 = arith.mulf %38, %39 : vector<16x16xf32>
    %cst_14 = arith.constant dense<0xFF800000> : vector<16xf32>
    %41 = vector.multi_reduction <maximumf>, %40, %cst_14 [1] : vector<16x16xf32> to vector<16xf32>
    %42 = vector.shape_cast %41 : vector<16xf32> to vector<16x1xf32>
    %43 = vector.broadcast %42 : vector<16x1xf32> to vector<16x16xf32>
    %44 = arith.subf %40, %43 : vector<16x16xf32>
    %45 = math.exp %44 : vector<16x16xf32>
    %cst_15 = arith.constant dense<0.000000e+00> : vector<16xf32>
    %46 = vector.multi_reduction <add>, %45, %cst_15 [1] : vector<16x16xf32> to vector<16xf32>
    %47 = vector.shape_cast %46 : vector<16xf32> to vector<16x1xf32>
    %48 = vector.broadcast %47 : vector<16x1xf32> to vector<16x16xf32>
    %49 = arith.divf %45, %48 : vector<16x16xf32>
    %c1 = arith.constant 1 : index
    %c0_16 = arith.constant 0 : index
    %c0_17 = arith.constant 0 : index
    %50 = vector.load %arg3[%c1, %c0_16, %c0_17] : memref<8x16x16xf32, #tpu.memory_space<vmem>>, vector<1x16x16xf32>
    %51 = vector.shape_cast %50 : vector<1x16x16xf32> to vector<16x16xf32>
    %52 = arith.addf %49, %51 : vector<16x16xf32>
    %53 = arith.truncf %52 : vector<16x16xf32> to vector<16x16xbf16>
    %cst_18 = arith.constant dense<0.000000e+00> : vector<16x16xf32>
    %54 = tpu.matmul %53, %37, %cst_18 {dimension_numbers = #tpu.dot_dimension_numbers<[1], [0], [0], [1], [0, 0, 1, 1], [], []>} : vector<16x16xbf16>, vector<16x16xbf16>, vector<16x16xf32> -> vector<16x16xf32>
    %55 = vector.extract_strided_slice %6 {offsets = [0, 32], sizes = [16, 16], strides = [1, 1]} : vector<16x128xf32> to vector<16x16xf32>
    %56 = arith.truncf %55 : vector<16x16xf32> to vector<16x16xbf16>
    %57 = vector.extract_strided_slice %7 {offsets = [0, 32], sizes = [16, 16], strides = [1, 1]} : vector<16x128xf32> to vector<16x16xf32>
    %58 = arith.truncf %57 : vector<16x16xf32> to vector<16x16xbf16>
    %59 = vector.extract_strided_slice %8 {offsets = [0, 32], sizes = [16, 16], strides = [1, 1]} : vector<16x128xf32> to vector<16x16xf32>
    %60 = arith.truncf %59 : vector<16x16xf32> to vector<16x16xbf16>
    %cst_19 = arith.constant dense<0.000000e+00> : vector<16x16xf32>
    %61 = tpu.matmul %56, %58, %cst_19 {dimension_numbers = #tpu.dot_dimension_numbers<[1], [1], [0], [0], [0, 0, 1, 0], [], []>} : vector<16x16xbf16>, vector<16x16xbf16>, vector<16x16xf32> -> vector<16x16xf32>
    %cst_20 = arith.constant 0.0883883461 : f32
    %62 = vector.broadcast %cst_20 : f32 to vector<16x16xf32>
    %63 = arith.mulf %61, %62 : vector<16x16xf32>
    %cst_21 = arith.constant dense<0xFF800000> : vector<16xf32>
    %64 = vector.multi_reduction <maximumf>, %63, %cst_21 [1] : vector<16x16xf32> to vector<16xf32>
    %65 = vector.shape_cast %64 : vector<16xf32> to vector<16x1xf32>
    %66 = vector.broadcast %65 : vector<16x1xf32> to vector<16x16xf32>
    %67 = arith.subf %63, %66 : vector<16x16xf32>
    %68 = math.exp %67 : vector<16x16xf32>
    %cst_22 = arith.constant dense<0.000000e+00> : vector<16xf32>
    %69 = vector.multi_reduction <add>, %68, %cst_22 [1] : vector<16x16xf32> to vector<16xf32>
    %70 = vector.shape_cast %69 : vector<16xf32> to vector<16x1xf32>
    %71 = vector.broadcast %70 : vector<16x1xf32> to vector<16x16xf32>
    %72 = arith.divf %68, %71 : vector<16x16xf32>
    %c2 = arith.constant 2 : index
    %c0_23 = arith.constant 0 : index
    %c0_24 = arith.constant 0 : index
    %73 = vector.load %arg3[%c2, %c0_23, %c0_24] : memref<8x16x16xf32, #tpu.memory_space<vmem>>, vector<1x16x16xf32>
    %74 = vector.shape_cast %73 : vector<1x16x16xf32> to vector<16x16xf32>
    %75 = arith.addf %72, %74 : vector<16x16xf32>
    %76 = arith.truncf %75 : vector<16x16xf32> to vector<16x16xbf16>
    %cst_25 = arith.constant dense<0.000000e+00> : vector<16x16xf32>
    %77 = tpu.matmul %76, %60, %cst_25 {dimension_numbers = #tpu.dot_dimension_numbers<[1], [0], [0], [1], [0, 0, 1, 1], [], []>} : vector<16x16xbf16>, vector<16x16xbf16>, vector<16x16xf32> -> vector<16x16xf32>
    %78 = vector.extract_strided_slice %6 {offsets = [0, 48], sizes = [16, 16], strides = [1, 1]} : vector<16x128xf32> to vector<16x16xf32>
    %79 = arith.truncf %78 : vector<16x16xf32> to vector<16x16xbf16>
    %80 = vector.extract_strided_slice %7 {offsets = [0, 48], sizes = [16, 16], strides = [1, 1]} : vector<16x128xf32> to vector<16x16xf32>
    %81 = arith.truncf %80 : vector<16x16xf32> to vector<16x16xbf16>
    %82 = vector.extract_strided_slice %8 {offsets = [0, 48], sizes = [16, 16], strides = [1, 1]} : vector<16x128xf32> to vector<16x16xf32>
    %83 = arith.truncf %82 : vector<16x16xf32> to vector<16x16xbf16>
    %cst_26 = arith.constant dense<0.000000e+00> : vector<16x16xf32>
    %84 = tpu.matmul %79, %81, %cst_26 {dimension_numbers = #tpu.dot_dimension_numbers<[1], [1], [0], [0], [0, 0, 1, 0], [], []>} : vector<16x16xbf16>, vector<16x16xbf16>, vector<16x16xf32> -> vector<16x16xf32>
    %cst_27 = arith.constant 0.0883883461 : f32
    %85 = vector.broadcast %cst_27 : f32 to vector<16x16xf32>
    %86 = arith.mulf %84, %85 : vector<16x16xf32>
    %cst_28 = arith.constant dense<0xFF800000> : vector<16xf32>
    %87 = vector.multi_reduction <maximumf>, %86, %cst_28 [1] : vector<16x16xf32> to vector<16xf32>
    %88 = vector.shape_cast %87 : vector<16xf32> to vector<16x1xf32>
    %89 = vector.broadcast %88 : vector<16x1xf32> to vector<16x16xf32>
    %90 = arith.subf %86, %89 : vector<16x16xf32>
    %91 = math.exp %90 : vector<16x16xf32>
    %cst_29 = arith.constant dense<0.000000e+00> : vector<16xf32>
    %92 = vector.multi_reduction <add>, %91, %cst_29 [1] : vector<16x16xf32> to vector<16xf32>
    %93 = vector.shape_cast %92 : vector<16xf32> to vector<16x1xf32>
    %94 = vector.broadcast %93 : vector<16x1xf32> to vector<16x16xf32>
    %95 = arith.divf %91, %94 : vector<16x16xf32>
    %c3 = arith.constant 3 : index
    %c0_30 = arith.constant 0 : index
    %c0_31 = arith.constant 0 : index
    %96 = vector.load %arg3[%c3, %c0_30, %c0_31] : memref<8x16x16xf32, #tpu.memory_space<vmem>>, vector<1x16x16xf32>
    %97 = vector.shape_cast %96 : vector<1x16x16xf32> to vector<16x16xf32>
    %98 = arith.addf %95, %97 : vector<16x16xf32>
    %99 = arith.truncf %98 : vector<16x16xf32> to vector<16x16xbf16>
    %cst_32 = arith.constant dense<0.000000e+00> : vector<16x16xf32>
    %100 = tpu.matmul %99, %83, %cst_32 {dimension_numbers = #tpu.dot_dimension_numbers<[1], [0], [0], [1], [0, 0, 1, 1], [], []>} : vector<16x16xbf16>, vector<16x16xbf16>, vector<16x16xf32> -> vector<16x16xf32>
    %101 = vector.extract_strided_slice %6 {offsets = [0, 64], sizes = [16, 16], strides = [1, 1]} : vector<16x128xf32> to vector<16x16xf32>
    %102 = arith.truncf %101 : vector<16x16xf32> to vector<16x16xbf16>
    %103 = vector.extract_strided_slice %7 {offsets = [0, 64], sizes = [16, 16], strides = [1, 1]} : vector<16x128xf32> to vector<16x16xf32>
    %104 = arith.truncf %103 : vector<16x16xf32> to vector<16x16xbf16>
    %105 = vector.extract_strided_slice %8 {offsets = [0, 64], sizes = [16, 16], strides = [1, 1]} : vector<16x128xf32> to vector<16x16xf32>
    %106 = arith.truncf %105 : vector<16x16xf32> to vector<16x16xbf16>
    %cst_33 = arith.constant dense<0.000000e+00> : vector<16x16xf32>
    %107 = tpu.matmul %102, %104, %cst_33 {dimension_numbers = #tpu.dot_dimension_numbers<[1], [1], [0], [0], [0, 0, 1, 0], [], []>} : vector<16x16xbf16>, vector<16x16xbf16>, vector<16x16xf32> -> vector<16x16xf32>
    %cst_34 = arith.constant 0.0883883461 : f32
    %108 = vector.broadcast %cst_34 : f32 to vector<16x16xf32>
    %109 = arith.mulf %107, %108 : vector<16x16xf32>
    %cst_35 = arith.constant dense<0xFF800000> : vector<16xf32>
    %110 = vector.multi_reduction <maximumf>, %109, %cst_35 [1] : vector<16x16xf32> to vector<16xf32>
    %111 = vector.shape_cast %110 : vector<16xf32> to vector<16x1xf32>
    %112 = vector.broadcast %111 : vector<16x1xf32> to vector<16x16xf32>
    %113 = arith.subf %109, %112 : vector<16x16xf32>
    %114 = math.exp %113 : vector<16x16xf32>
    %cst_36 = arith.constant dense<0.000000e+00> : vector<16xf32>
    %115 = vector.multi_reduction <add>, %114, %cst_36 [1] : vector<16x16xf32> to vector<16xf32>
    %116 = vector.shape_cast %115 : vector<16xf32> to vector<16x1xf32>
    %117 = vector.broadcast %116 : vector<16x1xf32> to vector<16x16xf32>
    %118 = arith.divf %114, %117 : vector<16x16xf32>
    %c4 = arith.constant 4 : index
    %c0_37 = arith.constant 0 : index
    %c0_38 = arith.constant 0 : index
    %119 = vector.load %arg3[%c4, %c0_37, %c0_38] : memref<8x16x16xf32, #tpu.memory_space<vmem>>, vector<1x16x16xf32>
    %120 = vector.shape_cast %119 : vector<1x16x16xf32> to vector<16x16xf32>
    %121 = arith.addf %118, %120 : vector<16x16xf32>
    %122 = arith.truncf %121 : vector<16x16xf32> to vector<16x16xbf16>
    %cst_39 = arith.constant dense<0.000000e+00> : vector<16x16xf32>
    %123 = tpu.matmul %122, %106, %cst_39 {dimension_numbers = #tpu.dot_dimension_numbers<[1], [0], [0], [1], [0, 0, 1, 1], [], []>} : vector<16x16xbf16>, vector<16x16xbf16>, vector<16x16xf32> -> vector<16x16xf32>
    %124 = vector.extract_strided_slice %6 {offsets = [0, 80], sizes = [16, 16], strides = [1, 1]} : vector<16x128xf32> to vector<16x16xf32>
    %125 = arith.truncf %124 : vector<16x16xf32> to vector<16x16xbf16>
    %126 = vector.extract_strided_slice %7 {offsets = [0, 80], sizes = [16, 16], strides = [1, 1]} : vector<16x128xf32> to vector<16x16xf32>
    %127 = arith.truncf %126 : vector<16x16xf32> to vector<16x16xbf16>
    %128 = vector.extract_strided_slice %8 {offsets = [0, 80], sizes = [16, 16], strides = [1, 1]} : vector<16x128xf32> to vector<16x16xf32>
    %129 = arith.truncf %128 : vector<16x16xf32> to vector<16x16xbf16>
    %cst_40 = arith.constant dense<0.000000e+00> : vector<16x16xf32>
    %130 = tpu.matmul %125, %127, %cst_40 {dimension_numbers = #tpu.dot_dimension_numbers<[1], [1], [0], [0], [0, 0, 1, 0], [], []>} : vector<16x16xbf16>, vector<16x16xbf16>, vector<16x16xf32> -> vector<16x16xf32>
    %cst_41 = arith.constant 0.0883883461 : f32
    %131 = vector.broadcast %cst_41 : f32 to vector<16x16xf32>
    %132 = arith.mulf %130, %131 : vector<16x16xf32>
    %cst_42 = arith.constant dense<0xFF800000> : vector<16xf32>
    %133 = vector.multi_reduction <maximumf>, %132, %cst_42 [1] : vector<16x16xf32> to vector<16xf32>
    %134 = vector.shape_cast %133 : vector<16xf32> to vector<16x1xf32>
    %135 = vector.broadcast %134 : vector<16x1xf32> to vector<16x16xf32>
    %136 = arith.subf %132, %135 : vector<16x16xf32>
    %137 = math.exp %136 : vector<16x16xf32>
    %cst_43 = arith.constant dense<0.000000e+00> : vector<16xf32>
    %138 = vector.multi_reduction <add>, %137, %cst_43 [1] : vector<16x16xf32> to vector<16xf32>
    %139 = vector.shape_cast %138 : vector<16xf32> to vector<16x1xf32>
    %140 = vector.broadcast %139 : vector<16x1xf32> to vector<16x16xf32>
    %141 = arith.divf %137, %140 : vector<16x16xf32>
    %c5 = arith.constant 5 : index
    %c0_44 = arith.constant 0 : index
    %c0_45 = arith.constant 0 : index
    %142 = vector.load %arg3[%c5, %c0_44, %c0_45] : memref<8x16x16xf32, #tpu.memory_space<vmem>>, vector<1x16x16xf32>
    %143 = vector.shape_cast %142 : vector<1x16x16xf32> to vector<16x16xf32>
    %144 = arith.addf %141, %143 : vector<16x16xf32>
    %145 = arith.truncf %144 : vector<16x16xf32> to vector<16x16xbf16>
    %cst_46 = arith.constant dense<0.000000e+00> : vector<16x16xf32>
    %146 = tpu.matmul %145, %129, %cst_46 {dimension_numbers = #tpu.dot_dimension_numbers<[1], [0], [0], [1], [0, 0, 1, 1], [], []>} : vector<16x16xbf16>, vector<16x16xbf16>, vector<16x16xf32> -> vector<16x16xf32>
    %147 = vector.extract_strided_slice %6 {offsets = [0, 96], sizes = [16, 16], strides = [1, 1]} : vector<16x128xf32> to vector<16x16xf32>
    %148 = arith.truncf %147 : vector<16x16xf32> to vector<16x16xbf16>
    %149 = vector.extract_strided_slice %7 {offsets = [0, 96], sizes = [16, 16], strides = [1, 1]} : vector<16x128xf32> to vector<16x16xf32>
    %150 = arith.truncf %149 : vector<16x16xf32> to vector<16x16xbf16>
    %151 = vector.extract_strided_slice %8 {offsets = [0, 96], sizes = [16, 16], strides = [1, 1]} : vector<16x128xf32> to vector<16x16xf32>
    %152 = arith.truncf %151 : vector<16x16xf32> to vector<16x16xbf16>
    %cst_47 = arith.constant dense<0.000000e+00> : vector<16x16xf32>
    %153 = tpu.matmul %148, %150, %cst_47 {dimension_numbers = #tpu.dot_dimension_numbers<[1], [1], [0], [0], [0, 0, 1, 0], [], []>} : vector<16x16xbf16>, vector<16x16xbf16>, vector<16x16xf32> -> vector<16x16xf32>
    %cst_48 = arith.constant 0.0883883461 : f32
    %154 = vector.broadcast %cst_48 : f32 to vector<16x16xf32>
    %155 = arith.mulf %153, %154 : vector<16x16xf32>
    %cst_49 = arith.constant dense<0xFF800000> : vector<16xf32>
    %156 = vector.multi_reduction <maximumf>, %155, %cst_49 [1] : vector<16x16xf32> to vector<16xf32>
    %157 = vector.shape_cast %156 : vector<16xf32> to vector<16x1xf32>
    %158 = vector.broadcast %157 : vector<16x1xf32> to vector<16x16xf32>
    %159 = arith.subf %155, %158 : vector<16x16xf32>
    %160 = math.exp %159 : vector<16x16xf32>
    %cst_50 = arith.constant dense<0.000000e+00> : vector<16xf32>
    %161 = vector.multi_reduction <add>, %160, %cst_50 [1] : vector<16x16xf32> to vector<16xf32>
    %162 = vector.shape_cast %161 : vector<16xf32> to vector<16x1xf32>
    %163 = vector.broadcast %162 : vector<16x1xf32> to vector<16x16xf32>
    %164 = arith.divf %160, %163 : vector<16x16xf32>
    %c6 = arith.constant 6 : index
    %c0_51 = arith.constant 0 : index
    %c0_52 = arith.constant 0 : index
    %165 = vector.load %arg3[%c6, %c0_51, %c0_52] : memref<8x16x16xf32, #tpu.memory_space<vmem>>, vector<1x16x16xf32>
    %166 = vector.shape_cast %165 : vector<1x16x16xf32> to vector<16x16xf32>
    %167 = arith.addf %164, %166 : vector<16x16xf32>
    %168 = arith.truncf %167 : vector<16x16xf32> to vector<16x16xbf16>
    %cst_53 = arith.constant dense<0.000000e+00> : vector<16x16xf32>
    %169 = tpu.matmul %168, %152, %cst_53 {dimension_numbers = #tpu.dot_dimension_numbers<[1], [0], [0], [1], [0, 0, 1, 1], [], []>} : vector<16x16xbf16>, vector<16x16xbf16>, vector<16x16xf32> -> vector<16x16xf32>
    %170 = vector.extract_strided_slice %6 {offsets = [0, 112], sizes = [16, 16], strides = [1, 1]} : vector<16x128xf32> to vector<16x16xf32>
    %171 = arith.truncf %170 : vector<16x16xf32> to vector<16x16xbf16>
    %172 = vector.extract_strided_slice %7 {offsets = [0, 112], sizes = [16, 16], strides = [1, 1]} : vector<16x128xf32> to vector<16x16xf32>
    %173 = arith.truncf %172 : vector<16x16xf32> to vector<16x16xbf16>
    %174 = vector.extract_strided_slice %8 {offsets = [0, 112], sizes = [16, 16], strides = [1, 1]} : vector<16x128xf32> to vector<16x16xf32>
    %175 = arith.truncf %174 : vector<16x16xf32> to vector<16x16xbf16>
    %cst_54 = arith.constant dense<0.000000e+00> : vector<16x16xf32>
    %176 = tpu.matmul %171, %173, %cst_54 {dimension_numbers = #tpu.dot_dimension_numbers<[1], [1], [0], [0], [0, 0, 1, 0], [], []>} : vector<16x16xbf16>, vector<16x16xbf16>, vector<16x16xf32> -> vector<16x16xf32>
    %cst_55 = arith.constant 0.0883883461 : f32
    %177 = vector.broadcast %cst_55 : f32 to vector<16x16xf32>
    %178 = arith.mulf %176, %177 : vector<16x16xf32>
    %cst_56 = arith.constant dense<0xFF800000> : vector<16xf32>
    %179 = vector.multi_reduction <maximumf>, %178, %cst_56 [1] : vector<16x16xf32> to vector<16xf32>
    %180 = vector.shape_cast %179 : vector<16xf32> to vector<16x1xf32>
    %181 = vector.broadcast %180 : vector<16x1xf32> to vector<16x16xf32>
    %182 = arith.subf %178, %181 : vector<16x16xf32>
    %183 = math.exp %182 : vector<16x16xf32>
    %cst_57 = arith.constant dense<0.000000e+00> : vector<16xf32>
    %184 = vector.multi_reduction <add>, %183, %cst_57 [1] : vector<16x16xf32> to vector<16xf32>
    %185 = vector.shape_cast %184 : vector<16xf32> to vector<16x1xf32>
    %186 = vector.broadcast %185 : vector<16x1xf32> to vector<16x16xf32>
    %187 = arith.divf %183, %186 : vector<16x16xf32>
    %c7 = arith.constant 7 : index
    %c0_58 = arith.constant 0 : index
    %c0_59 = arith.constant 0 : index
    %188 = vector.load %arg3[%c7, %c0_58, %c0_59] : memref<8x16x16xf32, #tpu.memory_space<vmem>>, vector<1x16x16xf32>
    %189 = vector.shape_cast %188 : vector<1x16x16xf32> to vector<16x16xf32>
    %190 = arith.addf %187, %189 : vector<16x16xf32>
    %191 = arith.truncf %190 : vector<16x16xf32> to vector<16x16xbf16>
    %cst_60 = arith.constant dense<0.000000e+00> : vector<16x16xf32>
    %192 = tpu.matmul %191, %175, %cst_60 {dimension_numbers = #tpu.dot_dimension_numbers<[1], [0], [0], [1], [0, 0, 1, 1], [], []>} : vector<16x16xbf16>, vector<16x16xbf16>, vector<16x16xf32> -> vector<16x16xf32>
    %193 = tpu.concatenate %31, %54, %77, %100, %123, %146, %169, %192 in 1 : vector<16x16xf32>, vector<16x16xf32>, vector<16x16xf32>, vector<16x16xf32>, vector<16x16xf32>, vector<16x16xf32>, vector<16x16xf32>, vector<16x16xf32> -> vector<16x128xf32>
    %cst_61 = arith.constant dense<0.000000e+00> : vector<16xf32>
    %194 = vector.multi_reduction <add>, %193, %cst_61 [1] : vector<16x128xf32> to vector<16xf32>
    %195 = vector.shape_cast %194 : vector<16xf32> to vector<16x1xf32>
    %cst_62 = arith.constant 1.280000e+02 : f32
    %196 = vector.broadcast %cst_62 : f32 to vector<16x1xf32>
    %197 = arith.divf %195, %196 : vector<16x1xf32>
    %198 = vector.broadcast %197 : vector<16x1xf32> to vector<16x128xf32>
    %199 = arith.subf %193, %198 : vector<16x128xf32>
    %200 = arith.mulf %199, %199 : vector<16x128xf32>
    %cst_63 = arith.constant dense<0.000000e+00> : vector<16xf32>
    %201 = vector.multi_reduction <add>, %200, %cst_63 [1] : vector<16x128xf32> to vector<16xf32>
    %202 = vector.shape_cast %201 : vector<16xf32> to vector<16x1xf32>
    %cst_64 = arith.constant 1.280000e+02 : f32
    %203 = vector.broadcast %cst_64 : f32 to vector<16x1xf32>
    %204 = arith.divf %202, %203 : vector<16x1xf32>
    %205 = vector.broadcast %197 : vector<16x1xf32> to vector<16x128xf32>
    %206 = arith.subf %193, %205 : vector<16x128xf32>
    %cst_65 = arith.constant 9.99999974E-6 : f32
    %207 = vector.broadcast %cst_65 : f32 to vector<16x1xf32>
    %208 = arith.addf %204, %207 : vector<16x1xf32>
    %209 = math.rsqrt %208 : vector<16x1xf32>
    %210 = vector.broadcast %209 : vector<16x1xf32> to vector<16x128xf32>
    %211 = arith.mulf %206, %210 : vector<16x128xf32>
    %c0_66 = arith.constant 0 : index
    %c0_67 = arith.constant 0 : index
    %212 = vector.load %arg4[%c0_66, %c0_67] : memref<1x128xf32, #tpu.memory_space<vmem>>, vector<1x128xf32>
    %213 = vector.broadcast %212 : vector<1x128xf32> to vector<16x128xf32>
    %214 = arith.mulf %211, %213 : vector<16x128xf32>
    %c0_68 = arith.constant 0 : index
    %c0_69 = arith.constant 0 : index
    %215 = vector.load %arg5[%c0_68, %c0_69] : memref<1x128xf32, #tpu.memory_space<vmem>>, vector<1x128xf32>
    %216 = vector.broadcast %215 : vector<1x128xf32> to vector<16x128xf32>
    %217 = arith.addf %214, %216 : vector<16x128xf32>
    %218 = arith.addf %1, %217 : vector<16x128xf32>
    %cst_70 = arith.constant dense<0.000000e+00> : vector<16xf32>
    %219 = vector.multi_reduction <add>, %218, %cst_70 [1] : vector<16x128xf32> to vector<16xf32>
    %220 = vector.shape_cast %219 : vector<16xf32> to vector<16x1xf32>
    %cst_71 = arith.constant 1.280000e+02 : f32
    %221 = vector.broadcast %cst_71 : f32 to vector<16x1xf32>
    %222 = arith.divf %220, %221 : vector<16x1xf32>
    %223 = vector.broadcast %222 : vector<16x1xf32> to vector<16x128xf32>
    %224 = arith.subf %218, %223 : vector<16x128xf32>
    %225 = arith.mulf %224, %224 : vector<16x128xf32>
    %cst_72 = arith.constant dense<0.000000e+00> : vector<16xf32>
    %226 = vector.multi_reduction <add>, %225, %cst_72 [1] : vector<16x128xf32> to vector<16xf32>
    %227 = vector.shape_cast %226 : vector<16xf32> to vector<16x1xf32>
    %cst_73 = arith.constant 1.280000e+02 : f32
    %228 = vector.broadcast %cst_73 : f32 to vector<16x1xf32>
    %229 = arith.divf %227, %228 : vector<16x1xf32>
    %230 = vector.broadcast %222 : vector<16x1xf32> to vector<16x128xf32>
    %231 = arith.subf %218, %230 : vector<16x128xf32>
    %cst_74 = arith.constant 9.99999974E-6 : f32
    %232 = vector.broadcast %cst_74 : f32 to vector<16x1xf32>
    %233 = arith.addf %229, %232 : vector<16x1xf32>
    %234 = math.rsqrt %233 : vector<16x1xf32>
    %235 = vector.broadcast %234 : vector<16x1xf32> to vector<16x128xf32>
    %236 = arith.mulf %231, %235 : vector<16x128xf32>
    %c0_75 = arith.constant 0 : index
    %c0_76 = arith.constant 0 : index
    %237 = vector.load %arg6[%c0_75, %c0_76] : memref<1x128xf32, #tpu.memory_space<vmem>>, vector<1x128xf32>
    %238 = vector.broadcast %237 : vector<1x128xf32> to vector<16x128xf32>
    %239 = arith.mulf %236, %238 : vector<16x128xf32>
    %c0_77 = arith.constant 0 : index
    %c0_78 = arith.constant 0 : index
    %240 = vector.load %arg7[%c0_77, %c0_78] : memref<1x128xf32, #tpu.memory_space<vmem>>, vector<1x128xf32>
    %241 = vector.broadcast %240 : vector<1x128xf32> to vector<16x128xf32>
    %242 = arith.addf %239, %241 : vector<16x128xf32>
    %c0_79 = arith.constant 0 : index
    %c0_80 = arith.constant 0 : index
    %c0_81 = arith.constant 0 : index
    %243 = vector.load %arg8[%c0_79, %c0_80, %c0_81] : memref<1x16x128xf32, #tpu.memory_space<vmem>>, vector<1x16x128xf32>
    %244 = vector.shape_cast %243 : vector<1x16x128xf32> to vector<16x128xf32>
    %245 = vector.shape_cast %242 : vector<16x128xf32> to vector<1x16x128xf32>
    tpu.vector_store %arg8[%c0_79, %c0_80, %c0_81], %245 {strides = array<i32>} : memref<1x16x128xf32, #tpu.memory_space<vmem>>, vector<1x16x128xf32>,
    return
  }
  func.func @transform_0(%arg0: i32) -> (i32, i32, i32) {
    %c0_i32 = arith.constant 0 : i32
    %c0_i32_0 = arith.constant 0 : i32
    %c0_i32_1 = arith.constant 0 : i32
    return %arg0, %c0_i32, %c0_i32_0 : i32, i32, i32
  }
  func.func @transform_1(%arg0: i32) -> (i32, i32) {
    %c0_i32 = arith.constant 0 : i32
    %c0_i32_0 = arith.constant 0 : i32
    %c0_i32_1 = arith.constant 0 : i32
    return %c0_i32, %c0_i32_0 : i32, i32
  }
  func.func @transform_2(%arg0: i32) -> (i32, i32, i32) {
    %c0_i32 = arith.constant 0 : i32
    %c0_i32_0 = arith.constant 0 : i32
    %c0_i32_1 = arith.constant 0 : i32
    %c0_i32_2 = arith.constant 0 : i32
    return %c0_i32, %c0_i32_0, %c0_i32_1 : i32, i32, i32
  }
  func.func @transform_3(%arg0: i32) -> (i32, i32) {
    %c0_i32 = arith.constant 0 : i32
    %c0_i32_0 = arith.constant 0 : i32
    %c0_i32_1 = arith.constant 0 : i32
    return %c0_i32, %c0_i32_0 : i32, i32
  }
  func.func @transform_4(%arg0: i32) -> (i32, i32) {
    %c0_i32 = arith.constant 0 : i32
    %c0_i32_0 = arith.constant 0 : i32
    %c0_i32_1 = arith.constant 0 : i32
    return %c0_i32, %c0_i32_0 : i32, i32
  }
  func.func @transform_5(%arg0: i32) -> (i32, i32) {
    %c0_i32 = arith.constant 0 : i32
    %c0_i32_0 = arith.constant 0 : i32
    %c0_i32_1 = arith.constant 0 : i32
    return %c0_i32, %c0_i32_0 : i32, i32
  }
  func.func @transform_6(%arg0: i32) -> (i32, i32) {
    %c0_i32 = arith.constant 0 : i32
    %c0_i32_0 = arith.constant 0 : i32
    %c0_i32_1 = arith.constant 0 : i32
    return %c0_i32, %c0_i32_0 : i32, i32
  }
  func.func @transform_7(%arg0: i32) -> (i32, i32, i32) {
    %c0_i32 = arith.constant 0 : i32
    %c0_i32_0 = arith.constant 0 : i32
    %c0_i32_1 = arith.constant 0 : i32
    return %arg0, %c0_i32, %c0_i32_0 : i32, i32, i32
  }
}

</mosaic_0001>

<llo_original>
// kernel: tpu_custom_call.1
$region0: #{tpu_custom_call.1}
  #allocation0 [shape = 'u32[]', space=smem, size = 0x4, offset = 0x4, fixed_abs, tag = 'smem constant byte address 0x4 - core index']
  #allocation1 [shape = 'u32[72,128]{1,0:T(1,128)}', space=vmem, size = 0x9000, scoped, tag = 'internal scratch']
  %s0 = inlined_call_operand.hbm [shape: f32[2,16,128], index: 0, kind: input, shape index: {}]
  %s1 = inlined_call_operand.hbm [shape: f32[128,384], index: 1, kind: input, shape index: {}]
  %s2 = inlined_call_operand.hbm [shape: f32[8,16,16], index: 2, kind: input, shape index: {}]
  %s3 = inlined_call_operand.vmem [shape: f32[1,128], index: 3, kind: input, shape index: {}]
  %s4 = inlined_call_operand.vmem [shape: f32[1,128], index: 4, kind: input, shape index: {}]
  %s5 = inlined_call_operand.vmem [shape: f32[1,128], index: 5, kind: input, shape index: {}]
  %s6 = inlined_call_operand.vmem [shape: f32[1,128], index: 6, kind: input, shape index: {}]
  %s7 = inlined_call_operand.hbm [shape: f32[2,16,128], index: 7, kind: output, shape index: {}]
  %s8 = sld [smem:[#allocation0]]
  $region73: #{tpu_custom_call.1} parent=0
    _
  %s10 = ssub.s32 1, %s8
  %s11 = scalar_select 0, %s10, %s8
  $region1: #{tpu_custom_call.1} parent=0
    #allocation2 [shape = 'u8[16384]{0}', space=vmem, size = 0x4000, scoped, tag = 'input window, operand 0']
    #allocation3 [shape = 's32[2]{0}', space=sflag, size = 0x8, scoped, tag = 'scoped memory for tpu_custom_call.1']
    #allocation4 [shape = 's32[2]{0}', space=sflag, size = 0x8, scoped, tag = 'scoped memory for tpu_custom_call.1']
    #allocation5 [shape = 'u8[196608]{0}', space=vmem, size = 0x30000, scoped, tag = 'input window, operand 1, single buffered']
    #allocation6 [shape = 's32[1]{0}', space=sflag, size = 0x4, scoped, tag = 'scoped memory for tpu_custom_call.1']
    #allocation7 [shape = 'u8[65536]{0}', space=vmem, size = 0x10000, scoped, tag = 'input window, operand 2, single buffered']
    #allocation8 [shape = 'u8[16384]{0}', space=vmem, size = 0x4000, scoped, tag = 'output window, operand 0']
    %12 = vsyncpa [#allocation3], 0
    %s13 = scalar_lea.sflag [#allocation3], 1
    %14 = vsyncpa %s13, 0
    %15 = vsyncpa [#allocation6], 0
    %16 = vsyncpa [#allocation4], 0
    %s17 = scalar_lea.sflag [#allocation4], 1
    %18 = vsyncpa %s17, 0
    loop: start=0, step=1, limit=4
    $region2: #{tpu_custom_call.1} parent=1 // loop_pre_header
      _
    $region3: #{tpu_custom_call.1} parent=1 // loop_header
      %s20 = sphi 0, %s24
      %p21 = scmp.ge.s32.totalorder %s20, 4
      %s30 = sphi 0, %s32
      %s33 = sphi 0, %s30
      %s34 = sphi 0, %s33
      %s50 = sphi 0, %s34
      %s54 = sphi 0, %s54
      %s56 = sphi 0, %s54
      %s57 = sphi 0, %s56
      %s71 = sphi 0, %s57
      %s75 = sphi 0, %s75
      %s77 = sphi 0, %s75
      %s78 = sphi 0, %s77
      %s92 = sphi 0, %s78
      %s96 = sphi 0, %s96
      %s98 = sphi 0, %s96
      %s99 = sphi 0, %s98
      %s113 = sphi 0, %s99
      %s117 = sphi 0, %s117
      %s119 = sphi 0, %s117
      %s120 = sphi 0, %s119
      %s134 = sphi 0, %s120
      %s138 = sphi 0, %s138
      %s140 = sphi 0, %s138
      %s141 = sphi 0, %s140
      %s155 = sphi 0, %s141
      %s159 = sphi 0, %s159
      %s161 = sphi 0, %s159
      %s162 = sphi 0, %s161
      %s176 = sphi 0, %s162
      %s182 = sphi 0, %s184
      %s185 = sphi 0, %s182
      %s186 = sphi 0, %s185
      %s202 = sphi 0, %s186
    $region4: #{tpu_custom_call.1} parent=1 // loop_header_branch
      %23 = sbr.rel (%p21) target = $region8
    $region5: #{tpu_custom_call.1} parent=1 // loop_body
      %s25 = ssub.s32 %s20, 1
      %s26 = ssub.s32 %s20, 2
      %s27 = sadd.s32 %s20, 1
      %s28 = ssub.s32 %s20, %s27
      %p29 = scmp.eq.s32.totalorder %s28, 0
      %s31 = sadd.s32 %s30, 1
      %s32 = scalar_select %p29, %s30, %s31
      %p35 = pneg %p29
      %p36 = scmp.eq.s32.totalorder %s20, 1
      %p37 = por %p35, %p36
      %p38 = scmp.ne.s32.totalorder %s30, %s33
      %p39 = scmp.eq.s32.totalorder %s20, 0
      %p40 = por %p38, %p39
      %p41 = scmp.ne.s32.totalorder %s30, %s33
      %p42 = scmp.eq.s32.totalorder %s25, 1
      %p43 = por %p41, %p42
      %p44 = scmp.ne.s32.totalorder %s33, %s34
      %p45 = scmp.eq.s32.totalorder %s25, 0
      %p46 = por %p44, %p45
      %p47 = scmp.ne.s32.totalorder %s33, %s34
      %p48 = scmp.eq.s32.totalorder %s26, 1
      %p49 = por %p47, %p48
      %p51 = scmp.ne.s32.totalorder %s34, %s50
      %p52 = scmp.eq.s32.totalorder %s26, 0
      %p53 = por %p51, %p52
      %s55 = sadd.s32 %s54, 1
      %p58 = scmp.eq.s32.totalorder %s20, 1
      %p59 = scmp.ne.s32.totalorder %s54, %s56
      %p60 = scmp.eq.s32.totalorder %s20, 0
      %p61 = por %p59, %p60
      %p62 = scmp.ne.s32.totalorder %s54, %s56
      %p63 = scmp.eq.s32.totalorder %s25, 1
      %p64 = por %p62, %p63
      %p65 = scmp.ne.s32.totalorder %s56, %s57
      %p66 = scmp.eq.s32.totalorder %s25, 0
      %p67 = por %p65, %p66
      %p68 = scmp.ne.s32.totalorder %s56, %s57
      %p69 = scmp.eq.s32.totalorder %s26, 1
      %p70 = por %p68, %p69
      %p72 = scmp.ne.s32.totalorder %s57, %s71
      %p73 = scmp.eq.s32.totalorder %s26, 0
      %p74 = por %p72, %p73
      %s76 = sadd.s32 %s75, 1
      %p79 = scmp.eq.s32.totalorder %s20, 1
      %p80 = scmp.ne.s32.totalorder %s75, %s77
      %p81 = scmp.eq.s32.totalorder %s20, 0
      %p82 = por %p80, %p81
      %p83 = scmp.ne.s32.totalorder %s75, %s77
      %p84 = scmp.eq.s32.totalorder %s25, 1
      %p85 = por %p83, %p84
      %p86 = scmp.ne.s32.totalorder %s77, %s78
      %p87 = scmp.eq.s32.totalorder %s25, 0
      %p88 = por %p86, %p87
      %p89 = scmp.ne.s32.totalorder %s77, %s78
      %p90 = scmp.eq.s32.totalorder %s26, 1
      %p91 = por %p89, %p90
      %p93 = scmp.ne.s32.totalorder %s78, %s92
      %p94 = scmp.eq.s32.totalorder %s26, 0
      %p95 = por %p93, %p94
      %s97 = sadd.s32 %s96, 1
      %p100 = scmp.eq.s32.totalorder %s20, 1
      %p101 = scmp.ne.s32.totalorder %s96, %s98
      %p102 = scmp.eq.s32.totalorder %s20, 0
      %p103 = por %p101, %p102
      %p104 = scmp.ne.s32.totalorder %s96, %s98
      %p105 = scmp.eq.s32.totalorder %s25, 1
      %p106 = por %p104, %p105
      %p107 = scmp.ne.s32.totalorder %s98, %s99
      %p108 = scmp.eq.s32.totalorder %s25, 0
      %p109 = por %p107, %p108
      %p110 = scmp.ne.s32.totalorder %s98, %s99
      %p111 = scmp.eq.s32.totalorder %s26, 1
      %p112 = por %p110, %p111
      %p114 = scmp.ne.s32.totalorder %s99, %s113
      %p115 = scmp.eq.s32.totalorder %s26, 0
      %p116 = por %p114, %p115
      %s118 = sadd.s32 %s117, 1
      %p121 = scmp.eq.s32.totalorder %s20, 1
      %p122 = scmp.ne.s32.totalorder %s117, %s119
      %p123 = scmp.eq.s32.totalorder %s20, 0
      %p124 = por %p122, %p123
      %p125 = scmp.ne.s32.totalorder %s117, %s119
      %p126 = scmp.eq.s32.totalorder %s25, 1
      %p127 = por %p125, %p126
      %p128 = scmp.ne.s32.totalorder %s119, %s120
      %p129 = scmp.eq.s32.totalorder %s25, 0
      %p130 = por %p128, %p129
      %p131 = scmp.ne.s32.totalorder %s119, %s120
      %p132 = scmp.eq.s32.totalorder %s26, 1
      %p133 = por %p131, %p132
      %p135 = scmp.ne.s32.totalorder %s120, %s134
      %p136 = scmp.eq.s32.totalorder %s26, 0
      %p137 = por %p135, %p136
      %s139 = sadd.s32 %s138, 1
      %p142 = scmp.eq.s32.totalorder %s20, 1
      %p143 = scmp.ne.s32.totalorder %s138, %s140
      %p144 = scmp.eq.s32.totalorder %s20, 0
      %p145 = por %p143, %p144
      %p146 = scmp.ne.s32.totalorder %s138, %s140
      %p147 = scmp.eq.s32.totalorder %s25, 1
      %p148 = por %p146, %p147
      %p149 = scmp.ne.s32.totalorder %s140, %s141
      %p150 = scmp.eq.s32.totalorder %s25, 0
      %p151 = por %p149, %p150
      %p152 = scmp.ne.s32.totalorder %s140, %s141
      %p153 = scmp.eq.s32.totalorder %s26, 1
      %p154 = por %p152, %p153
      %p156 = scmp.ne.s32.totalorder %s141, %s155
      %p157 = scmp.eq.s32.totalorder %s26, 0
      %p158 = por %p156, %p157
      %s160 = sadd.s32 %s159, 1
      %p163 = scmp.eq.s32.totalorder %s20, 1
      %p164 = scmp.ne.s32.totalorder %s159, %s161
      %p165 = scmp.eq.s32.totalorder %s20, 0
      %p166 = por %p164, %p165
      %p167 = scmp.ne.s32.totalorder %s159, %s161
      %p168 = scmp.eq.s32.totalorder %s25, 1
      %p169 = por %p167, %p168
      %p170 = scmp.ne.s32.totalorder %s161, %s162
      %p171 = scmp.eq.s32.totalorder %s25, 0
      %p172 = por %p170, %p171
      %p173 = scmp.ne.s32.totalorder %s161, %s162
      %p174 = scmp.eq.s32.totalorder %s26, 1
      %p175 = por %p173, %p174
      %p177 = scmp.ne.s32.totalorder %s162, %s176
      %p178 = scmp.eq.s32.totalorder %s26, 0
      %p179 = por %p177, %p178
      %s180 = ssub.s32 %s20, %s27
      %p181 = scmp.eq.s32.totalorder %s180, 0
      %s183 = sadd.s32 %s182, 1
      %s184 = scalar_select %p181, %s182, %s183
      %p187 = pneg %p181
      %p188 = scmp.eq.s32.totalorder %s20, 1
      %p189 = por %p187, %p188
      %p190 = scmp.ne.s32.totalorder %s182, %s185
      %p191 = scmp.eq.s32.totalorder %s20, 0
      %p192 = por %p190, %p191
      %p193 = scmp.ne.s32.totalorder %s182, %s185
      %p194 = scmp.eq.s32.totalorder %s25, 1
      %p195 = por %p193, %p194
      %p196 = scmp.ne.s32.totalorder %s185, %s186
      %p197 = scmp.eq.s32.totalorder %s25, 0
      %p198 = por %p196, %p197
      %p199 = scmp.ne.s32.totalorder %s185, %s186
      %p200 = scmp.eq.s32.totalorder %s26, 1
      %p201 = por %p199, %p200
      %p203 = scmp.ne.s32.totalorder %s186, %s202
      %p204 = scmp.eq.s32.totalorder %s26, 0
      %p205 = por %p203, %p204
      %p206 = scmp.le.s32.totalorder 1, %s20
      %p207 = scmp.lt.s32.totalorder %s20, 3
      %p208 = pnand %p206, %p207
      %p209 = pneg %p208
      // Predicated region
      $region9: #{tpu_custom_call.1} parent=5 // pred_check
        _
      $region10: #{tpu_custom_call.1} parent=5 // pred_check_branch
        %211 = sbr.rel (%p208) target = $region12
      $region11: #{tpu_custom_call.1} parent=5 // pred_region
        %s212 = ssub.s32 %s20, 1
        // Predicated region
        $region13: #{tpu_custom_call.1} parent=11 // pred_check
          %p213 = pneg %p67
        $region14: #{tpu_custom_call.1} parent=11 // pred_check_branch
          %215 = sbr.rel (%p213) target = $region16
        $region15: #{tpu_custom_call.1} parent=11 // pred_region
          %217 = vsyncadd [#allocation6], 0
          %s218 = sshll.u32 %s1, 4
          %s219 = int_to_ptr.hbm [resolvable:$true] %s218
          %s220 = sshll.u32 [#allocation5], 4
          %s221 = int_to_ptr.vmem [resolvable:$true] %s220
          %226 = dma.hbm_to_vmem [thread:$0]  %s219, 6144, %s221, [#allocation6], 384, 384, 24
        $region16: #{tpu_custom_call.1} parent=11 // pred_fallthru
          _
        // Predicated region
        $region17: #{tpu_custom_call.1} parent=11 // pred_check
          %p227 = pneg %p88
        $region18: #{tpu_custom_call.1} parent=11 // pred_check_branch
          %229 = sbr.rel (%p227) target = $region20
        $region19: #{tpu_custom_call.1} parent=11 // pred_region
          %231 = vsyncadd [#allocation6], 0
          %s232 = sshll.u32 %s2, 4
          %s233 = int_to_ptr.hbm [resolvable:$true] %s232
          %s234 = sshll.u32 [#allocation7], 4
          %s235 = int_to_ptr.vmem [resolvable:$true] %s234
          %240 = dma.hbm_to_vmem [thread:$0]  %s233, 2048, %s235, [#allocation6], 128, 128, 8
        $region20: #{tpu_custom_call.1} parent=11 // pred_fallthru
          _
        // Predicated region
        $region21: #{tpu_custom_call.1} parent=11 // pred_check
          %p241 = pneg %p109
        $region22: #{tpu_custom_call.1} parent=11 // pred_check_branch
          %243 = sbr.rel (%p241) target = $region24
        $region23: #{tpu_custom_call.1} parent=11 // pred_region
          _
        $region24: #{tpu_custom_call.1} parent=11 // pred_fallthru
          _
        // Predicated region
        $region25: #{tpu_custom_call.1} parent=11 // pred_check
          %p244 = pneg %p130
        $region26: #{tpu_custom_call.1} parent=11 // pred_check_branch
          %246 = sbr.rel (%p244) target = $region28
        $region27: #{tpu_custom_call.1} parent=11 // pred_region
          _
        $region28: #{tpu_custom_call.1} parent=11 // pred_fallthru
          _
        // Predicated region
        $region29: #{tpu_custom_call.1} parent=11 // pred_check
          %p247 = pneg %p151
        $region30: #{tpu_custom_call.1} parent=11 // pred_check_branch
          %249 = sbr.rel (%p247) target = $region32
        $region31: #{tpu_custom_call.1} parent=11 // pred_region
          _
        $region32: #{tpu_custom_call.1} parent=11 // pred_fallthru
          _
        // Predicated region
        $region33: #{tpu_custom_call.1} parent=11 // pred_check
          %p250 = pneg %p172
        $region34: #{tpu_custom_call.1} parent=11 // pred_check_branch
          %252 = sbr.rel (%p250) target = $region36
        $region35: #{tpu_custom_call.1} parent=11 // pred_region
          _
        $region36: #{tpu_custom_call.1} parent=11 // pred_fallthru
          _
      $region12: #{tpu_custom_call.1} parent=5 // pred_fallthru
        _
      %p253 = scmp.lt.s32.totalorder %s20, 2
      // Predicated region
      $region37: #{tpu_custom_call.1} parent=5 // pred_check
        %p254 = pneg %p253
      $region38: #{tpu_custom_call.1} parent=5 // pred_check_branch
        %256 = sbr.rel (%p254) target = $region40
      $region39: #{tpu_custom_call.1} parent=5 // pred_region
        // Predicated region
        $region41: #{tpu_custom_call.1} parent=39 // pred_check
          %p257 = pneg %p40
        $region42: #{tpu_custom_call.1} parent=39 // pred_check_branch
          %259 = sbr.rel (%p257) target = $region44
        $region43: #{tpu_custom_call.1} parent=39 // pred_region
          %s260 = sand.u32 %s30, 1
          %s261 = scalar_lea.sflag [#allocation3], %s260
          %s262 = sand.u32 %s30, 1
          %s263 = smul.addr %s262, 16
          %s264 = scalar_lea.vmem [#allocation2], %s263
          %266 = vsyncadd %s261, 0
          %s267 = smul.addr %s20, 2
          %s268 = smul.addr %s267, 8
          %s269 = scalar_lea.hbm %s0, %s268
          %s270 = sshll.u32 %s269, 4
          %s271 = int_to_ptr.hbm [resolvable:$true] %s270
          %s272 = sshll.u32 %s264, 4
          %s273 = int_to_ptr.vmem [resolvable:$true] %s272
          %278 = dma.hbm_to_vmem [thread:$0]  %s271, 256, %s273, %s261, 128, 128, 8
        $region44: #{tpu_custom_call.1} parent=39 // pred_fallthru
          _
      $region40: #{tpu_custom_call.1} parent=5 // pred_fallthru
        _
      %p279 = scmp.le.s32.totalorder 1, %s20
      %p280 = scmp.lt.s32.totalorder %s20, 3
      %p281 = pnand %p279, %p280
      %p282 = pneg %p281
      // Predicated region
      $region45: #{tpu_custom_call.1} parent=5 // pred_check
        _
      $region46: #{tpu_custom_call.1} parent=5 // pred_check_branch
        %284 = sbr.rel (%p281) target = $region48
      $region47: #{tpu_custom_call.1} parent=5 // pred_region
        %s285 = ssub.s32 %s20, 1
        %s286 = sand.u32 %s33, 1
        %s287 = scalar_lea.sflag [#allocation3], %s286
        %s288 = sand.u32 %s33, 1
        %s289 = smul.addr %s288, 16
        %s290 = scalar_lea.vmem [#allocation2], %s289
        // Predicated region
        $region49: #{tpu_custom_call.1} parent=47 // pred_check
          %p291 = pneg %p46
        $region50: #{tpu_custom_call.1} parent=47 // pred_check_branch
          %293 = sbr.rel (%p291) target = $region52
        $region51: #{tpu_custom_call.1} parent=47 // pred_region
          %295 = dma.done %s287, 256
        $region52: #{tpu_custom_call.1} parent=47 // pred_fallthru
          _
        // Predicated region
        $region53: #{tpu_custom_call.1} parent=47 // pred_check
          %p296 = pneg %p67
        $region54: #{tpu_custom_call.1} parent=47 // pred_check_branch
          %298 = sbr.rel (%p296) target = $region56
        $region55: #{tpu_custom_call.1} parent=47 // pred_region
          %300 = dma.done [#allocation6], 6144
        $region56: #{tpu_custom_call.1} parent=47 // pred_fallthru
          _
        // Predicated region
        $region57: #{tpu_custom_call.1} parent=47 // pred_check
          %p301 = pneg %p88
        $region58: #{tpu_custom_call.1} parent=47 // pred_check_branch
          %303 = sbr.rel (%p301) target = $region60
        $region59: #{tpu_custom_call.1} parent=47 // pred_region
          %305 = dma.done [#allocation6], 2048
        $region60: #{tpu_custom_call.1} parent=47 // pred_fallthru
          _
        %s306 = sand.u32 %s33, 1
        %s307 = scalar_lea.sflag [#allocation3], %s306
        %s308 = sand.u32 %s33, 1
        %s309 = smul.addr %s308, 16
        %s310 = scalar_lea.vmem [#allocation2], %s309
        %p311 = pneg %p46
        %p312 = pneg %p43
        %p313 = pneg %p67
        %p314 = pneg %p64
        %p315 = pneg %p88
        %p316 = pneg %p85
        %p317 = pneg %p109
        %p318 = pneg %p106
        %p319 = pneg %p130
        %p320 = pneg %p127
        %p321 = pneg %p151
        %p322 = pneg %p148
        %p323 = pneg %p172
        %p324 = pneg %p169
        %p325 = pneg %p198
        %p326 = pneg %p195
        %s327 = sand.u32 %s185, 1
        %s328 = scalar_lea.sflag [#allocation4], %s327
        %s329 = sand.u32 %s185, 1
        %s330 = smul.addr %s329, 16
        %s331 = scalar_lea.vmem [#allocation8], %s330
        %v333 = vld [vmem:[%s290] sm:$0xff]
        %v334 = vld [vmem:[%s290 + $0x8] sm:$0xff]
        %v335 = vpack.c.bf16 %v334, %v333
        %v336 = vld [vmem:[#allocation5] sm:$0xff]
        %v337 = vld [vmem:[#allocation5 + $0x8] sm:$0xff]
        %v338 = vld [vmem:[#allocation5 + $0x10] sm:$0xff]
        %v339 = vld [vmem:[#allocation5 + $0x18] sm:$0xff]
        %v340 = vld [vmem:[#allocation5 + $0x20] sm:$0xff]
        %v341 = vld [vmem:[#allocation5 + $0x28] sm:$0xff]
        %v342 = vld [vmem:[#allocation5 + $0x30] sm:$0xff]
        %v343 = vld [vmem:[#allocation5 + $0x38] sm:$0xff]
        %v344 = vld [vmem:[#allocation5 + $0x40] sm:$0xff]
        %v345 = vld [vmem:[#allocation5 + $0x48] sm:$0xff]
        %v346 = vld [vmem:[#allocation5 + $0x50] sm:$0xff]
        %v347 = vld [vmem:[#allocation5 + $0x58] sm:$0xff]
        %v348 = vld [vmem:[#allocation5 + $0x60] sm:$0xff]
        %v349 = vld [vmem:[#allocation5 + $0x68] sm:$0xff]
        %v350 = vld [vmem:[#allocation5 + $0x70] sm:$0xff]
        %v351 = vld [vmem:[#allocation5 + $0x78] sm:$0xff]
        %v352 = vld [vmem:[#allocation5 + $0x80] sm:$0xff]
        %v353 = vld [vmem:[#allocation5 + $0x88] sm:$0xff]
        %v354 = vld [vmem:[#allocation5 + $0x90] sm:$0xff]
        %v355 = vld [vmem:[#allocation5 + $0x98] sm:$0xff]
        %v356 = vld [vmem:[#allocation5 + $0xa0] sm:$0xff]
        %v357 = vld [vmem:[#allocation5 + $0xa8] sm:$0xff]
        %v358 = vld [vmem:[#allocation5 + $0xb0] sm:$0xff]
        %v359 = vld [vmem:[#allocation5 + $0xb8] sm:$0xff]
        %v360 = vld [vmem:[#allocation5 + $0xc0] sm:$0xff]
        %v361 = vld [vmem:[#allocation5 + $0xc8] sm:$0xff]
        %v362 = vld [vmem:[#allocation5 + $0xd0] sm:$0xff]
        %v363 = vld [vmem:[#allocation5 + $0xd8] sm:$0xff]
        %v364 = vld [vmem:[#allocation5 + $0xe0] sm:$0xff]
        %v365 = vld [vmem:[#allocation5 + $0xe8] sm:$0xff]
        %v366 = vld [vmem:[#allocation5 + $0xf0] sm:$0xff]
        %v367 = vld [vmem:[#allocation5 + $0xf8] sm:$0xff]
        %v368 = vld [vmem:[#allocation5 + $0x100] sm:$0xff]
        %v369 = vld [vmem:[#allocation5 + $0x108] sm:$0xff]
        %v370 = vld [vmem:[#allocation5 + $0x110] sm:$0xff]
        %v371 = vld [vmem:[#allocation5 + $0x118] sm:$0xff]
        %v372 = vld [vmem:[#allocation5 + $0x120] sm:$0xff]
        %v373 = vld [vmem:[#allocation5 + $0x128] sm:$0xff]
        %v374 = vld [vmem:[#allocation5 + $0x130] sm:$0xff]
        %v375 = vld [vmem:[#allocation5 + $0x138] sm:$0xff]
        %v376 = vld [vmem:[#allocation5 + $0x140] sm:$0xff]
        %v377 = vld [vmem:[#allocation5 + $0x148] sm:$0xff]
        %v378 = vld [vmem:[#allocation5 + $0x150] sm:$0xff]
        %v379 = vld [vmem:[#allocation5 + $0x158] sm:$0xff]
        %v380 = vld [vmem:[#allocation5 + $0x160] sm:$0xff]
        %v381 = vld [vmem:[#allocation5 + $0x168] sm:$0xff]
        %v382 = vld [vmem:[#allocation5 + $0x170] sm:$0xff]
        %v383 = vld [vmem:[#allocation5 + $0x178] sm:$0xff]
        %v384 = vpack.c.bf16 %v339, %v336
        %v385 = vpack.c.bf16 %v340, %v337
        %v386 = vpack.c.bf16 %v341, %v338
        %v387 = vpack.c.bf16 %v345, %v342
        %v388 = vpack.c.bf16 %v346, %v343
        %v389 = vpack.c.bf16 %v347, %v344
        %v390 = vpack.c.bf16 %v351, %v348
        %v391 = vpack.c.bf16 %v352, %v349
        %v392 = vpack.c.bf16 %v353, %v350
        %v393 = vpack.c.bf16 %v357, %v354
        %v394 = vpack.c.bf16 %v358, %v355
        %v395 = vpack.c.bf16 %v359, %v356
        %v396 = vpack.c.bf16 %v363, %v360
        %v397 = vpack.c.bf16 %v364, %v361
        %v398 = vpack.c.bf16 %v365, %v362
        %v399 = vpack.c.bf16 %v369, %v366
        %v400 = vpack.c.bf16 %v370, %v367
        %v401 = vpack.c.bf16 %v371, %v368
        %v402 = vpack.c.bf16 %v375, %v372
        %v403 = vpack.c.bf16 %v376, %v373
        %v404 = vpack.c.bf16 %v377, %v374
        %v405 = vpack.c.bf16 %v381, %v378
        %v406 = vpack.c.bf16 %v382, %v379
        %v407 = vpack.c.bf16 %v383, %v380
        %408 = vmatpush.bf16.msra.mxu0 %v405
        %409 = vmatpush.bf16.msra.mxu0 %v402
        %410 = vmatpush.bf16.msra.mxu0 %v399
        %411 = vmatpush.bf16.msra.mxu0 %v396
        %412 = vmatpush.bf16.msra.mxu0 %v393
        %413 = vmatpush.bf16.msra.mxu0 %v390
        %414 = vmatpush.bf16.msra.mxu0 %v387
        %415 = vmatpush.bf16.msra.mxu0 %v384
        %416 = vmatmul.bf16.gmra.mxu0 %v335
        %v417 = vpop.f32.mrf.mxu0
        %v418 = vadd.f32 0.0, %v417
        %v419 = vpop.f32.mrf.mxu0
        %v420 = vadd.f32 0.0, %v419
        %421 = vdwg.mxu0
        %422 = vmatpush.bf16.msra.mxu0 %v406
        %423 = vmatpush.bf16.msra.mxu0 %v403
        %424 = vmatpush.bf16.msra.mxu0 %v400
        %425 = vmatpush.bf16.msra.mxu0 %v397
        %426 = vmatpush.bf16.msra.mxu0 %v394
        %427 = vmatpush.bf16.msra.mxu0 %v391
        %428 = vmatpush.bf16.msra.mxu0 %v388
        %429 = vmatpush.bf16.msra.mxu0 %v385
        %430 = vmatmul.bf16.gmra.mxu0 %v335
        %v431 = vpop.f32.mrf.mxu0
        %v432 = vadd.f32 0.0, %v431
        %v433 = vpop.f32.mrf.mxu0
        %v434 = vadd.f32 0.0, %v433
        %435 = vdwg.mxu0
        %436 = vmatpush.bf16.msra.mxu0 %v407
        %437 = vmatpush.bf16.msra.mxu0 %v404
        %438 = vmatpush.bf16.msra.mxu0 %v401
        %439 = vmatpush.bf16.msra.mxu0 %v398
        %440 = vmatpush.bf16.msra.mxu0 %v395
        %441 = vmatpush.bf16.msra.mxu0 %v392
        %442 = vmatpush.bf16.msra.mxu0 %v389
        %443 = vmatpush.bf16.msra.mxu0 %v386
        %444 = vmatmul.bf16.gmra.mxu0 %v335
        %v445 = vpop.f32.mrf.mxu0
        %v446 = vadd.f32 0.0, %v445
        %v447 = vpop.f32.mrf.mxu0
        %v448 = vadd.f32 0.0, %v447
        %449 = vdwg.mxu0
        %v450 = vpack.c.bf16 %v420, %v418
        %v451 = vpack.c.bf16 %v434, %v432
        %v452 = vpack.c.bf16 %v448, %v446
        %vm453 = vcmask 130048
        %v455 = vsel %vm453, %v450, 0
        %v458 = vsel %vm453, %v451, 0
        %460 = vmatpush.bf16.xpose.msra.mxu0 0
        %461 = vmatpush.bf16.xpose.msra.mxu0 0
        %462 = vmatpush.bf16.xpose.msra.mxu0 0
        %463 = vmatpush.bf16.xpose.msra.mxu0 0
        %464 = vmatpush.bf16.xpose.msra.mxu0 0
        %465 = vmatpush.bf16.xpose.msra.mxu0 0
        %466 = vmatpush.bf16.xpose.msra.mxu0 0
        %467 = vmatpush.bf16.xpose.msra.mxu0 %v458
        %468 = vmatmul.bf16.gmra.mxu0 %v455
        %v469 = vpop.f32.mrf.mxu0
        %v470 = vadd.f32 0.0, %v469
        %v471 = vpop.f32.mrf.mxu0
        %v472 = vadd.f32 0.0, %v471
        %473 = vdwg.mxu0
        %v474 = vmul.f32 %v470, 0.088388346
        %v475 = vmul.f32 %v472, 0.088388346
        %v476 = vsel %vm453, %v474, -inf
        %477 = vmax.xlane.f32.xlu0 %v476
        %v478 = vpop.xlane.xlu0 %477
        %v479 = vsel %vm453, %v475, -inf
        %480 = vmax.xlane.f32.xlu0 %v479
        %v481 = vpop.xlane.xlu0 %480
        %v482 = vsub.f32 %v474, %v478
        %v483 = vsub.f32 %v475, %v481
        %v484 = vmul.f32 %v482, 1.442695
        %v485 = vpow.pop %v484
        %v486 = vmul.f32 %v483, 1.442695
        %v487 = vpow.pop %v486
        %v488 = vsel %vm453, %v485, 0.0
        %489 = vadd.xlane.f32.xlu0 %v488
        %v490 = vpop.xlane.xlu0 %489
        %v491 = vsel %vm453, %v487, 0.0
        %492 = vadd.xlane.f32.xlu0 %v491
        %v493 = vpop.xlane.xlu0 %492
        %v494 = vrcp.pop %v490
        %v495 = vmul.f32 %v490, %v494
        %v496 = vsub.f32 1.0, %v495
        %v497 = vmul.f32 %v494, %v496
        %v498 = vadd.f32 %v494, %v497
        %vm499 = vweird.f32 %v490
        %vm500 = vweird.f32 %v494
        %vm501 = vmor %vm499, %vm500
        %v502 = vsel %vm501, %v494, %v498
        %v503 = vand.u32 2147483647, %v490
        %vm504 = vcmp.eq.f32.partialorder %v503, 8.507059e+37
        %v505 = vand.u32 %v490, 2147483648
        %v506 = vor.u32 1.1754944e-38, %v505
        %v507 = vsel %vm504, %v506, %v502
        %v508 = vmul.f32 %v485, %v507
        %v509 = vrcp.pop %v493
        %v510 = vmul.f32 %v493, %v509
        %v511 = vsub.f32 1.0, %v510
        %v512 = vmul.f32 %v509, %v511
        %v513 = vadd.f32 %v509, %v512
        %vm514 = vweird.f32 %v493
        %vm515 = vweird.f32 %v509
        %vm516 = vmor %vm514, %vm515
        %v517 = vsel %vm516, %v509, %v513
        %v518 = vand.u32 2147483647, %v493
        %vm519 = vcmp.eq.f32.partialorder %v518, 8.507059e+37
        %v520 = vand.u32 %v493, 2147483648
        %v521 = vor.u32 1.1754944e-38, %v520
        %v522 = vsel %vm519, %v521, %v517
        %v523 = vmul.f32 %v487, %v522
        %v524 = vld [vmem:[#allocation7] sm:$0xff]
        %v525 = vld [vmem:[#allocation7 + $0x8] sm:$0xff]
        %v526 = vadd.f32 %v508, %v524
        %v527 = vadd.f32 %v523, %v525
        %v528 = vpack.c.bf16 %v527, %v526
        %v530 = vsel %vm453, %v528, 0
        %532 = vmatpush.bf16.msra.mxu0 0
        %533 = vmatpush.bf16.msra.mxu0 0
        %534 = vmatpush.bf16.msra.mxu0 0
        %535 = vmatpush.bf16.msra.mxu0 0
        %536 = vmatpush.bf16.msra.mxu0 0
        %537 = vmatpush.bf16.msra.mxu0 0
        %538 = vmatpush.bf16.msra.mxu0 0
        %539 = vmatpush.bf16.msra.mxu0 %v452
        %540 = vmatmul.bf16.gmra.mxu0 %v530
        %v541 = vpop.f32.mrf.mxu0
        %v542 = vadd.f32 0.0, %v541
        %v543 = vpop.f32.mrf.mxu0
        %v544 = vadd.f32 0.0, %v543
        %545 = vdwg.mxu0
        %547 = vrot.lane.b32.xlu0 %v450, 112
        %v548 = vpop.permute.xlu0 %547
        %550 = vrot.lane.b32.xlu0 %v451, 112
        %v551 = vpop.permute.xlu0 %550
        %v553 = vsel %vm453, %v548, 0
        %v556 = vsel %vm453, %v551, 0
        %558 = vmatpush.bf16.xpose.msra.mxu0 0
        %559 = vmatpush.bf16.xpose.msra.mxu0 0
        %560 = vmatpush.bf16.xpose.msra.mxu0 0
        %561 = vmatpush.bf16.xpose.msra.mxu0 0
        %562 = vmatpush.bf16.xpose.msra.mxu0 0
        %563 = vmatpush.bf16.xpose.msra.mxu0 0
        %564 = vmatpush.bf16.xpose.msra.mxu0 0
        %565 = vmatpush.bf16.xpose.msra.mxu0 %v556
        %566 = vmatmul.bf16.gmra.mxu0 %v553
        %v567 = vpop.f32.mrf.mxu0
        %v568 = vadd.f32 0.0, %v567
        %v569 = vpop.f32.mrf.mxu0
        %v570 = vadd.f32 0.0, %v569
        %571 = vdwg.mxu0
        %v572 = vmul.f32 %v568, 0.088388346
        %v573 = vmul.f32 %v570, 0.088388346
        %v574 = vsel %vm453, %v572, -inf
        %575 = vmax.xlane.f32.xlu0 %v574
        %v576 = vpop.xlane.xlu0 %575
        %v577 = vsel %vm453, %v573, -inf
        %578 = vmax.xlane.f32.xlu0 %v577
        %v579 = vpop.xlane.xlu0 %578
        %v580 = vsub.f32 %v572, %v576
        %v581 = vsub.f32 %v573, %v579
        %v582 = vmul.f32 %v580, 1.442695
        %v583 = vpow.pop %v582
        %v584 = vmul.f32 %v581, 1.442695
        %v585 = vpow.pop %v584
        %v586 = vsel %vm453, %v583, 0.0
        %587 = vadd.xlane.f32.xlu0 %v586
        %v588 = vpop.xlane.xlu0 %587
        %v589 = vsel %vm453, %v585, 0.0
        %590 = vadd.xlane.f32.xlu0 %v589
        %v591 = vpop.xlane.xlu0 %590
        %v592 = vrcp.pop %v588
        %v593 = vmul.f32 %v588, %v592
        %v594 = vsub.f32 1.0, %v593
        %v595 = vmul.f32 %v592, %v594
        %v596 = vadd.f32 %v592, %v595
        %vm597 = vweird.f32 %v588
        %vm598 = vweird.f32 %v592
        %vm599 = vmor %vm597, %vm598
        %v600 = vsel %vm599, %v592, %v596
        %v601 = vand.u32 2147483647, %v588
        %vm602 = vcmp.eq.f32.partialorder %v601, 8.507059e+37
        %v603 = vand.u32 %v588, 2147483648
        %v604 = vor.u32 1.1754944e-38, %v603
        %v605 = vsel %vm602, %v604, %v600
        %v606 = vmul.f32 %v583, %v605
        %v607 = vrcp.pop %v591
        %v608 = vmul.f32 %v591, %v607
        %v609 = vsub.f32 1.0, %v608
        %v610 = vmul.f32 %v607, %v609
        %v611 = vadd.f32 %v607, %v610
        %vm612 = vweird.f32 %v591
        %vm613 = vweird.f32 %v607
        %vm614 = vmor %vm612, %vm613
        %v615 = vsel %vm614, %v607, %v611
        %v616 = vand.u32 2147483647, %v591
        %vm617 = vcmp.eq.f32.partialorder %v616, 8.507059e+37
        %v618 = vand.u32 %v591, 2147483648
        %v619 = vor.u32 1.1754944e-38, %v618
        %v620 = vsel %vm617, %v619, %v615
        %v621 = vmul.f32 %v585, %v620
        %s622 = scalar_lea.vmem [#allocation7], 16
        %v623 = vld [vmem:[%s622] sm:$0xff]
        %v624 = vld [vmem:[%s622 + $0x8] sm:$0xff]
        %v625 = vadd.f32 %v606, %v623
        %v626 = vadd.f32 %v621, %v624
        %v627 = vpack.c.bf16 %v626, %v625
        %629 = vrot.lane.b32.xlu0 %v452, 112
        %v630 = vpop.permute.xlu0 %629
        %v633 = vsel %vm453, %v627, 0
        %635 = vmatpush.bf16.msra.mxu0 0
        %636 = vmatpush.bf16.msra.mxu0 0
        %637 = vmatpush.bf16.msra.mxu0 0
        %638 = vmatpush.bf16.msra.mxu0 0
        %639 = vmatpush.bf16.msra.mxu0 0
        %640 = vmatpush.bf16.msra.mxu0 0
        %641 = vmatpush.bf16.msra.mxu0 0
        %642 = vmatpush.bf16.msra.mxu0 %v630
        %643 = vmatmul.bf16.gmra.mxu0 %v633
        %v644 = vpop.f32.mrf.mxu0
        %v645 = vadd.f32 0.0, %v644
        %v646 = vpop.f32.mrf.mxu0
        %v647 = vadd.f32 0.0, %v646
        %648 = vdwg.mxu0
        %649 = vrot.lane.b32.xlu0 %v450, 96
        %v650 = vpop.permute.xlu0 %649
        %651 = vrot.lane.b32.xlu0 %v451, 96
        %v652 = vpop.permute.xlu0 %651
        %v654 = vsel %vm453, %v650, 0
        %v657 = vsel %vm453, %v652, 0
        %659 = vmatpush.bf16.xpose.msra.mxu0 0
        %660 = vmatpush.bf16.xpose.msra.mxu0 0
        %661 = vmatpush.bf16.xpose.msra.mxu0 0
        %662 = vmatpush.bf16.xpose.msra.mxu0 0
        %663 = vmatpush.bf16.xpose.msra.mxu0 0
        %664 = vmatpush.bf16.xpose.msra.mxu0 0
        %665 = vmatpush.bf16.xpose.msra.mxu0 0
        %666 = vmatpush.bf16.xpose.msra.mxu0 %v657
        %667 = vmatmul.bf16.gmra.mxu0 %v654
        %v668 = vpop.f32.mrf.mxu0
        %v669 = vadd.f32 0.0, %v668
        %v670 = vpop.f32.mrf.mxu0
        %v671 = vadd.f32 0.0, %v670
        %672 = vdwg.mxu0
        %v673 = vmul.f32 %v669, 0.088388346
        %v674 = vmul.f32 %v671, 0.088388346
        %v675 = vsel %vm453, %v673, -inf
        %676 = vmax.xlane.f32.xlu0 %v675
        %v677 = vpop.xlane.xlu0 %676
        %v678 = vsel %vm453, %v674, -inf
        %679 = vmax.xlane.f32.xlu0 %v678
        %v680 = vpop.xlane.xlu0 %679
        %v681 = vsub.f32 %v673, %v677
        %v682 = vsub.f32 %v674, %v680
        %v683 = vmul.f32 %v681, 1.442695
        %v684 = vpow.pop %v683
        %v685 = vmul.f32 %v682, 1.442695
        %v686 = vpow.pop %v685
        %v687 = vsel %vm453, %v684, 0.0
        %688 = vadd.xlane.f32.xlu0 %v687
        %v689 = vpop.xlane.xlu0 %688
        %v690 = vsel %vm453, %v686, 0.0
        %691 = vadd.xlane.f32.xlu0 %v690
        %v692 = vpop.xlane.xlu0 %691
        %v693 = vrcp.pop %v689
        %v694 = vmul.f32 %v689, %v693
        %v695 = vsub.f32 1.0, %v694
        %v696 = vmul.f32 %v693, %v695
        %v697 = vadd.f32 %v693, %v696
        %vm698 = vweird.f32 %v689
        %vm699 = vweird.f32 %v693
        %vm700 = vmor %vm698, %vm699
        %v701 = vsel %vm700, %v693, %v697
        %v702 = vand.u32 2147483647, %v689
        %vm703 = vcmp.eq.f32.partialorder %v702, 8.507059e+37
        %v704 = vand.u32 %v689, 2147483648
        %v705 = vor.u32 1.1754944e-38, %v704
        %v706 = vsel %vm703, %v705, %v701
        %v707 = vmul.f32 %v684, %v706
        %v708 = vrcp.pop %v692
        %v709 = vmul.f32 %v692, %v708
        %v710 = vsub.f32 1.0, %v709
        %v711 = vmul.f32 %v708, %v710
        %v712 = vadd.f32 %v708, %v711
        %vm713 = vweird.f32 %v692
        %vm714 = vweird.f32 %v708
        %vm715 = vmor %vm713, %vm714
        %v716 = vsel %vm715, %v708, %v712
        %v717 = vand.u32 2147483647, %v692
        %vm718 = vcmp.eq.f32.partialorder %v717, 8.507059e+37
        %v719 = vand.u32 %v692, 2147483648
        %v720 = vor.u32 1.1754944e-38, %v719
        %v721 = vsel %vm718, %v720, %v716
        %v722 = vmul.f32 %v686, %v721
        %s723 = scalar_lea.vmem [#allocation7], 32
        %v724 = vld [vmem:[%s723] sm:$0xff]
        %v725 = vld [vmem:[%s723 + $0x8] sm:$0xff]
        %v726 = vadd.f32 %v707, %v724
        %v727 = vadd.f32 %v722, %v725
        %v728 = vpack.c.bf16 %v727, %v726
        %729 = vrot.lane.b32.xlu0 %v452, 96
        %v730 = vpop.permute.xlu0 %729
        %v733 = vsel %vm453, %v728, 0
        %735 = vmatpush.bf16.msra.mxu0 0
        %736 = vmatpush.bf16.msra.mxu0 0
        %737 = vmatpush.bf16.msra.mxu0 0
        %738 = vmatpush.bf16.msra.mxu0 0
        %739 = vmatpush.bf16.msra.mxu0 0
        %740 = vmatpush.bf16.msra.mxu0 0
        %741 = vmatpush.bf16.msra.mxu0 0
        %742 = vmatpush.bf16.msra.mxu0 %v730
        %743 = vmatmul.bf16.gmra.mxu0 %v733
        %v744 = vpop.f32.mrf.mxu0
        %v745 = vadd.f32 0.0, %v744
        %v746 = vpop.f32.mrf.mxu0
        %v747 = vadd.f32 0.0, %v746
        %748 = vdwg.mxu0
        %749 = vrot.lane.b32.xlu0 %v450, 80
        %v750 = vpop.permute.xlu0 %749
        %751 = vrot.lane.b32.xlu0 %v451, 80
        %v752 = vpop.permute.xlu0 %751
        %v754 = vsel %vm453, %v750, 0
        %v757 = vsel %vm453, %v752, 0
        %759 = vmatpush.bf16.xpose.msra.mxu0 0
        %760 = vmatpush.bf16.xpose.msra.mxu0 0
        %761 = vmatpush.bf16.xpose.msra.mxu0 0
        %762 = vmatpush.bf16.xpose.msra.mxu0 0
        %763 = vmatpush.bf16.xpose.msra.mxu0 0
        %764 = vmatpush.bf16.xpose.msra.mxu0 0
        %765 = vmatpush.bf16.xpose.msra.mxu0 0
        %766 = vmatpush.bf16.xpose.msra.mxu0 %v757
        %767 = vmatmul.bf16.gmra.mxu0 %v754
        %v768 = vpop.f32.mrf.mxu0
        %v769 = vadd.f32 0.0, %v768
        %v770 = vpop.f32.mrf.mxu0
        %v771 = vadd.f32 0.0, %v770
        %772 = vdwg.mxu0
        %v773 = vmul.f32 %v769, 0.088388346
        %v774 = vmul.f32 %v771, 0.088388346
        %v775 = vsel %vm453, %v773, -inf
        %776 = vmax.xlane.f32.xlu0 %v775
        %v777 = vpop.xlane.xlu0 %776
        %v778 = vsel %vm453, %v774, -inf
        %779 = vmax.xlane.f32.xlu0 %v778
        %v780 = vpop.xlane.xlu0 %779
        %v781 = vsub.f32 %v773, %v777
        %v782 = vsub.f32 %v774, %v780
        %v783 = vmul.f32 %v781, 1.442695
        %v784 = vpow.pop %v783
        %v785 = vmul.f32 %v782, 1.442695
        %v786 = vpow.pop %v785
        %v787 = vsel %vm453, %v784, 0.0
        %788 = vadd.xlane.f32.xlu0 %v787
        %v789 = vpop.xlane.xlu0 %788
        %v790 = vsel %vm453, %v786, 0.0
        %791 = vadd.xlane.f32.xlu0 %v790
        %v792 = vpop.xlane.xlu0 %791
        %v793 = vrcp.pop %v789
        %v794 = vmul.f32 %v789, %v793
        %v795 = vsub.f32 1.0, %v794
        %v796 = vmul.f32 %v793, %v795
        %v797 = vadd.f32 %v793, %v796
        %vm798 = vweird.f32 %v789
        %vm799 = vweird.f32 %v793
        %vm800 = vmor %vm798, %vm799
        %v801 = vsel %vm800, %v793, %v797
        %v802 = vand.u32 2147483647, %v789
        %vm803 = vcmp.eq.f32.partialorder %v802, 8.507059e+37
        %v804 = vand.u32 %v789, 2147483648
        %v805 = vor.u32 1.1754944e-38, %v804
        %v806 = vsel %vm803, %v805, %v801
        %v807 = vmul.f32 %v784, %v806
        %v808 = vrcp.pop %v792
        %v809 = vmul.f32 %v792, %v808
        %v810 = vsub.f32 1.0, %v809
        %v811 = vmul.f32 %v808, %v810
        %v812 = vadd.f32 %v808, %v811
        %vm813 = vweird.f32 %v792
        %vm814 = vweird.f32 %v808
        %vm815 = vmor %vm813, %vm814
        %v816 = vsel %vm815, %v808, %v812
        %v817 = vand.u32 2147483647, %v792
        %vm818 = vcmp.eq.f32.partialorder %v817, 8.507059e+37
        %v819 = vand.u32 %v792, 2147483648
        %v820 = vor.u32 1.1754944e-38, %v819
        %v821 = vsel %vm818, %v820, %v816
        %v822 = vmul.f32 %v786, %v821
        %s823 = scalar_lea.vmem [#allocation7], 48
        %v824 = vld [vmem:[%s823] sm:$0xff]
        %v825 = vld [vmem:[%s823 + $0x8] sm:$0xff]
        %v826 = vadd.f32 %v807, %v824
        %v827 = vadd.f32 %v822, %v825
        %v828 = vpack.c.bf16 %v827, %v826
        %829 = vrot.lane.b32.xlu0 %v452, 80
        %v830 = vpop.permute.xlu0 %829
        %v833 = vsel %vm453, %v828, 0
        %835 = vmatpush.bf16.msra.mxu0 0
        %836 = vmatpush.bf16.msra.mxu0 0
        %837 = vmatpush.bf16.msra.mxu0 0
        %838 = vmatpush.bf16.msra.mxu0 0
        %839 = vmatpush.bf16.msra.mxu0 0
        %840 = vmatpush.bf16.msra.mxu0 0
        %841 = vmatpush.bf16.msra.mxu0 0
        %842 = vmatpush.bf16.msra.mxu0 %v830
        %843 = vmatmul.bf16.gmra.mxu0 %v833
        %v844 = vpop.f32.mrf.mxu0
        %v845 = vadd.f32 0.0, %v844
        %v846 = vpop.f32.mrf.mxu0
        %v847 = vadd.f32 0.0, %v846
        %848 = vdwg.mxu0
        %849 = vrot.lane.b32.xlu0 %v450, 64
        %v850 = vpop.permute.xlu0 %849
        %851 = vrot.lane.b32.xlu0 %v451, 64
        %v852 = vpop.permute.xlu0 %851
        %v854 = vsel %vm453, %v850, 0
        %v857 = vsel %vm453, %v852, 0
        %859 = vmatpush.bf16.xpose.msra.mxu0 0
        %860 = vmatpush.bf16.xpose.msra.mxu0 0
        %861 = vmatpush.bf16.xpose.msra.mxu0 0
        %862 = vmatpush.bf16.xpose.msra.mxu0 0
        %863 = vmatpush.bf16.xpose.msra.mxu0 0
        %864 = vmatpush.bf16.xpose.msra.mxu0 0
        %865 = vmatpush.bf16.xpose.msra.mxu0 0
        %866 = vmatpush.bf16.xpose.msra.mxu0 %v857
        %867 = vmatmul.bf16.gmra.mxu0 %v854
        %v868 = vpop.f32.mrf.mxu0
        %v869 = vadd.f32 0.0, %v868
        %v870 = vpop.f32.mrf.mxu0
        %v871 = vadd.f32 0.0, %v870
        %872 = vdwg.mxu0
        %v873 = vmul.f32 %v869, 0.088388346
        %v874 = vmul.f32 %v871, 0.088388346
        %v875 = vsel %vm453, %v873, -inf
        %876 = vmax.xlane.f32.xlu0 %v875
        %v877 = vpop.xlane.xlu0 %876
        %v878 = vsel %vm453, %v874, -inf
        %879 = vmax.xlane.f32.xlu0 %v878
        %v880 = vpop.xlane.xlu0 %879
        %v881 = vsub.f32 %v873, %v877
        %v882 = vsub.f32 %v874, %v880
        %v883 = vmul.f32 %v881, 1.442695
        %v884 = vpow.pop %v883
        %v885 = vmul.f32 %v882, 1.442695
        %v886 = vpow.pop %v885
        %v887 = vsel %vm453, %v884, 0.0
        %888 = vadd.xlane.f32.xlu0 %v887
        %v889 = vpop.xlane.xlu0 %888
        %v890 = vsel %vm453, %v886, 0.0
        %891 = vadd.xlane.f32.xlu0 %v890
        %v892 = vpop.xlane.xlu0 %891
        %v893 = vrcp.pop %v889
        %v894 = vmul.f32 %v889, %v893
        %v895 = vsub.f32 1.0, %v894
        %v896 = vmul.f32 %v893, %v895
        %v897 = vadd.f32 %v893, %v896
        %vm898 = vweird.f32 %v889
        %vm899 = vweird.f32 %v893
        %vm900 = vmor %vm898, %vm899
        %v901 = vsel %vm900, %v893, %v897
        %v902 = vand.u32 2147483647, %v889
        %vm903 = vcmp.eq.f32.partialorder %v902, 8.507059e+37
        %v904 = vand.u32 %v889, 2147483648
        %v905 = vor.u32 1.1754944e-38, %v904
        %v906 = vsel %vm903, %v905, %v901
        %v907 = vmul.f32 %v884, %v906
        %v908 = vrcp.pop %v892
        %v909 = vmul.f32 %v892, %v908
        %v910 = vsub.f32 1.0, %v909
        %v911 = vmul.f32 %v908, %v910
        %v912 = vadd.f32 %v908, %v911
        %vm913 = vweird.f32 %v892
        %vm914 = vweird.f32 %v908
        %vm915 = vmor %vm913, %vm914
        %v916 = vsel %vm915, %v908, %v912
        %v917 = vand.u32 2147483647, %v892
        %vm918 = vcmp.eq.f32.partialorder %v917, 8.507059e+37
        %v919 = vand.u32 %v892, 2147483648
        %v920 = vor.u32 1.1754944e-38, %v919
        %v921 = vsel %vm918, %v920, %v916
        %v922 = vmul.f32 %v886, %v921
        %s923 = scalar_lea.vmem [#allocation7], 64
        %v924 = vld [vmem:[%s923] sm:$0xff]
        %v925 = vld [vmem:[%s923 + $0x8] sm:$0xff]
        %v926 = vadd.f32 %v907, %v924
        %v927 = vadd.f32 %v922, %v925
        %v928 = vpack.c.bf16 %v927, %v926
        %929 = vrot.lane.b32.xlu0 %v452, 64
        %v930 = vpop.permute.xlu0 %929
        %v933 = vsel %vm453, %v928, 0
        %935 = vmatpush.bf16.msra.mxu0 0
        %936 = vmatpush.bf16.msra.mxu0 0
        %937 = vmatpush.bf16.msra.mxu0 0
        %938 = vmatpush.bf16.msra.mxu0 0
        %939 = vmatpush.bf16.msra.mxu0 0
        %940 = vmatpush.bf16.msra.mxu0 0
        %941 = vmatpush.bf16.msra.mxu0 0
        %942 = vmatpush.bf16.msra.mxu0 %v930
        %943 = vmatmul.bf16.gmra.mxu0 %v933
        %v944 = vpop.f32.mrf.mxu0
        %v945 = vadd.f32 0.0, %v944
        %v946 = vpop.f32.mrf.mxu0
        %v947 = vadd.f32 0.0, %v946
        %948 = vdwg.mxu0
        %949 = vrot.lane.b32.xlu0 %v450, 48
        %v950 = vpop.permute.xlu0 %949
        %951 = vrot.lane.b32.xlu0 %v451, 48
        %v952 = vpop.permute.xlu0 %951
        %v954 = vsel %vm453, %v950, 0
        %v957 = vsel %vm453, %v952, 0
        %959 = vmatpush.bf16.xpose.msra.mxu0 0
        %960 = vmatpush.bf16.xpose.msra.mxu0 0
        %961 = vmatpush.bf16.xpose.msra.mxu0 0
        %962 = vmatpush.bf16.xpose.msra.mxu0 0
        %963 = vmatpush.bf16.xpose.msra.mxu0 0
        %964 = vmatpush.bf16.xpose.msra.mxu0 0
        %965 = vmatpush.bf16.xpose.msra.mxu0 0
        %966 = vmatpush.bf16.xpose.msra.mxu0 %v957
        %967 = vmatmul.bf16.gmra.mxu0 %v954
        %v968 = vpop.f32.mrf.mxu0
        %v969 = vadd.f32 0.0, %v968
        %v970 = vpop.f32.mrf.mxu0
        %v971 = vadd.f32 0.0, %v970
        %972 = vdwg.mxu0
        %v973 = vmul.f32 %v969, 0.088388346
        %v974 = vmul.f32 %v971, 0.088388346
        %v975 = vsel %vm453, %v973, -inf
        %976 = vmax.xlane.f32.xlu0 %v975
        %v977 = vpop.xlane.xlu0 %976
        %v978 = vsel %vm453, %v974, -inf
        %979 = vmax.xlane.f32.xlu0 %v978
        %v980 = vpop.xlane.xlu0 %979
        %v981 = vsub.f32 %v973, %v977
        %v982 = vsub.f32 %v974, %v980
        %v983 = vmul.f32 %v981, 1.442695
        %v984 = vpow.pop %v983
        %v985 = vmul.f32 %v982, 1.442695
        %v986 = vpow.pop %v985
        %v987 = vsel %vm453, %v984, 0.0
        %988 = vadd.xlane.f32.xlu0 %v987
        %v989 = vpop.xlane.xlu0 %988
        %v990 = vsel %vm453, %v986, 0.0
        %991 = vadd.xlane.f32.xlu0 %v990
        %v992 = vpop.xlane.xlu0 %991
        %v993 = vrcp.pop %v989
        %v994 = vmul.f32 %v989, %v993
        %v995 = vsub.f32 1.0, %v994
        %v996 = vmul.f32 %v993, %v995
        %v997 = vadd.f32 %v993, %v996
        %vm998 = vweird.f32 %v989
        %vm999 = vweird.f32 %v993
        %vm1000 = vmor %vm998, %vm999
        %v1001 = vsel %vm1000, %v993, %v997
        %v1002 = vand.u32 2147483647, %v989
        %vm1003 = vcmp.eq.f32.partialorder %v1002, 8.507059e+37
        %v1004 = vand.u32 %v989, 2147483648
        %v1005 = vor.u32 1.1754944e-38, %v1004
        %v1006 = vsel %vm1003, %v1005, %v1001
        %v1007 = vmul.f32 %v984, %v1006
        %v1008 = vrcp.pop %v992
        %v1009 = vmul.f32 %v992, %v1008
        %v1010 = vsub.f32 1.0, %v1009
        %v1011 = vmul.f32 %v1008, %v1010
        %v1012 = vadd.f32 %v1008, %v1011
        %vm1013 = vweird.f32 %v992
        %vm1014 = vweird.f32 %v1008
        %vm1015 = vmor %vm1013, %vm1014
        %v1016 = vsel %vm1015, %v1008, %v1012
        %v1017 = vand.u32 2147483647, %v992
        %vm1018 = vcmp.eq.f32.partialorder %v1017, 8.507059e+37
        %v1019 = vand.u32 %v992, 2147483648
        %v1020 = vor.u32 1.1754944e-38, %v1019
        %v1021 = vsel %vm1018, %v1020, %v1016
        %v1022 = vmul.f32 %v986, %v1021
        %s1023 = scalar_lea.vmem [#allocation7], 80
        %v1024 = vld [vmem:[%s1023] sm:$0xff]
        %v1025 = vld [vmem:[%s1023 + $0x8] sm:$0xff]
        %v1026 = vadd.f32 %v1007, %v1024
        %v1027 = vadd.f32 %v1022, %v1025
        %v1028 = vpack.c.bf16 %v1027, %v1026
        %1029 = vrot.lane.b32.xlu0 %v452, 48
        %v1030 = vpop.permute.xlu0 %1029
        %v1033 = vsel %vm453, %v1028, 0
        %1035 = vmatpush.bf16.msra.mxu0 0
        %1036 = vmatpush.bf16.msra.mxu0 0
        %1037 = vmatpush.bf16.msra.mxu0 0
        %1038 = vmatpush.bf16.msra.mxu0 0
        %1039 = vmatpush.bf16.msra.mxu0 0
        %1040 = vmatpush.bf16.msra.mxu0 0
        %1041 = vmatpush.bf16.msra.mxu0 0
        %1042 = vmatpush.bf16.msra.mxu0 %v1030
        %1043 = vmatmul.bf16.gmra.mxu0 %v1033
        %v1044 = vpop.f32.mrf.mxu0
        %v1045 = vadd.f32 0.0, %v1044
        %v1046 = vpop.f32.mrf.mxu0
        %v1047 = vadd.f32 0.0, %v1046
        %1048 = vdwg.mxu0
        %1049 = vrot.lane.b32.xlu0 %v450, 32
        %v1050 = vpop.permute.xlu0 %1049
        %1051 = vrot.lane.b32.xlu0 %v451, 32
        %v1052 = vpop.permute.xlu0 %1051
        %v1054 = vsel %vm453, %v1050, 0
        %v1057 = vsel %vm453, %v1052, 0
        %1059 = vmatpush.bf16.xpose.msra.mxu0 0
        %1060 = vmatpush.bf16.xpose.msra.mxu0 0
        %1061 = vmatpush.bf16.xpose.msra.mxu0 0
        %1062 = vmatpush.bf16.xpose.msra.mxu0 0
        %1063 = vmatpush.bf16.xpose.msra.mxu0 0
        %1064 = vmatpush.bf16.xpose.msra.mxu0 0
        %1065 = vmatpush.bf16.xpose.msra.mxu0 0
        %1066 = vmatpush.bf16.xpose.msra.mxu0 %v1057
        %1067 = vmatmul.bf16.gmra.mxu0 %v1054
        %v1068 = vpop.f32.mrf.mxu0
        %v1069 = vadd.f32 0.0, %v1068
        %v1070 = vpop.f32.mrf.mxu0
        %v1071 = vadd.f32 0.0, %v1070
        %1072 = vdwg.mxu0
        %v1073 = vmul.f32 %v1069, 0.088388346
        %v1074 = vmul.f32 %v1071, 0.088388346
        %v1075 = vsel %vm453, %v1073, -inf
        %1076 = vmax.xlane.f32.xlu0 %v1075
        %v1077 = vpop.xlane.xlu0 %1076
        %v1078 = vsel %vm453, %v1074, -inf
        %1079 = vmax.xlane.f32.xlu0 %v1078
        %v1080 = vpop.xlane.xlu0 %1079
        %v1081 = vsub.f32 %v1073, %v1077
        %v1082 = vsub.f32 %v1074, %v1080
        %v1083 = vmul.f32 %v1081, 1.442695
        %v1084 = vpow.pop %v1083
        %v1085 = vmul.f32 %v1082, 1.442695
        %v1086 = vpow.pop %v1085
        %v1087 = vsel %vm453, %v1084, 0.0
        %1088 = vadd.xlane.f32.xlu0 %v1087
        %v1089 = vpop.xlane.xlu0 %1088
        %v1090 = vsel %vm453, %v1086, 0.0
        %1091 = vadd.xlane.f32.xlu0 %v1090
        %v1092 = vpop.xlane.xlu0 %1091
        %v1093 = vrcp.pop %v1089
        %v1094 = vmul.f32 %v1089, %v1093
        %v1095 = vsub.f32 1.0, %v1094
        %v1096 = vmul.f32 %v1093, %v1095
        %v1097 = vadd.f32 %v1093, %v1096
        %vm1098 = vweird.f32 %v1089
        %vm1099 = vweird.f32 %v1093
        %vm1100 = vmor %vm1098, %vm1099
        %v1101 = vsel %vm1100, %v1093, %v1097
        %v1102 = vand.u32 2147483647, %v1089
        %vm1103 = vcmp.eq.f32.partialorder %v1102, 8.507059e+37
        %v1104 = vand.u32 %v1089, 2147483648
        %v1105 = vor.u32 1.1754944e-38, %v1104
        %v1106 = vsel %vm1103, %v1105, %v1101
        %v1107 = vmul.f32 %v1084, %v1106
        %v1108 = vrcp.pop %v1092
        %v1109 = vmul.f32 %v1092, %v1108
        %v1110 = vsub.f32 1.0, %v1109
        %v1111 = vmul.f32 %v1108, %v1110
        %v1112 = vadd.f32 %v1108, %v1111
        %vm1113 = vweird.f32 %v1092
        %vm1114 = vweird.f32 %v1108
        %vm1115 = vmor %vm1113, %vm1114
        %v1116 = vsel %vm1115, %v1108, %v1112
        %v1117 = vand.u32 2147483647, %v1092
        %vm1118 = vcmp.eq.f32.partialorder %v1117, 8.507059e+37
        %v1119 = vand.u32 %v1092, 2147483648
        %v1120 = vor.u32 1.1754944e-38, %v1119
        %v1121 = vsel %vm1118, %v1120, %v1116
        %v1122 = vmul.f32 %v1086, %v1121
        %s1123 = scalar_lea.vmem [#allocation7], 96
        %v1124 = vld [vmem:[%s1123] sm:$0xff]
        %v1125 = vld [vmem:[%s1123 + $0x8] sm:$0xff]
        %v1126 = vadd.f32 %v1107, %v1124
        %v1127 = vadd.f32 %v1122, %v1125
        %v1128 = vpack.c.bf16 %v1127, %v1126
        %1129 = vrot.lane.b32.xlu0 %v452, 32
        %v1130 = vpop.permute.xlu0 %1129
        %v1133 = vsel %vm453, %v1128, 0
        %1135 = vmatpush.bf16.msra.mxu0 0
        %1136 = vmatpush.bf16.msra.mxu0 0
        %1137 = vmatpush.bf16.msra.mxu0 0
        %1138 = vmatpush.bf16.msra.mxu0 0
        %1139 = vmatpush.bf16.msra.mxu0 0
        %1140 = vmatpush.bf16.msra.mxu0 0
        %1141 = vmatpush.bf16.msra.mxu0 0
        %1142 = vmatpush.bf16.msra.mxu0 %v1130
        %1143 = vmatmul.bf16.gmra.mxu0 %v1133
        %v1144 = vpop.f32.mrf.mxu0
        %v1145 = vadd.f32 0.0, %v1144
        %v1146 = vpop.f32.mrf.mxu0
        %v1147 = vadd.f32 0.0, %v1146
        %1148 = vdwg.mxu0
        %1149 = vrot.lane.b32.xlu0 %v450, 16
        %v1150 = vpop.permute.xlu0 %1149
        %1151 = vrot.lane.b32.xlu0 %v451, 16
        %v1152 = vpop.permute.xlu0 %1151
        %v1154 = vsel %vm453, %v1150, 0
        %v1157 = vsel %vm453, %v1152, 0
        %1159 = vmatpush.bf16.xpose.msra.mxu0 0
        %1160 = vmatpush.bf16.xpose.msra.mxu0 0
        %1161 = vmatpush.bf16.xpose.msra.mxu0 0
        %1162 = vmatpush.bf16.xpose.msra.mxu0 0
        %1163 = vmatpush.bf16.xpose.msra.mxu0 0
        %1164 = vmatpush.bf16.xpose.msra.mxu0 0
        %1165 = vmatpush.bf16.xpose.msra.mxu0 0
        %1166 = vmatpush.bf16.xpose.msra.mxu0 %v1157
        %1167 = vmatmul.bf16.gmra.mxu0 %v1154
        %v1168 = vpop.f32.mrf.mxu0
        %v1169 = vadd.f32 0.0, %v1168
        %v1170 = vpop.f32.mrf.mxu0
        %v1171 = vadd.f32 0.0, %v1170
        %1172 = vdwg.mxu0
        %v1173 = vmul.f32 %v1169, 0.088388346
        %v1174 = vmul.f32 %v1171, 0.088388346
        %v1175 = vsel %vm453, %v1173, -inf
        %1176 = vmax.xlane.f32.xlu0 %v1175
        %v1177 = vpop.xlane.xlu0 %1176
        %v1178 = vsel %vm453, %v1174, -inf
        %1179 = vmax.xlane.f32.xlu0 %v1178
        %v1180 = vpop.xlane.xlu0 %1179
        %v1181 = vsub.f32 %v1173, %v1177
        %v1182 = vsub.f32 %v1174, %v1180
        %v1183 = vmul.f32 %v1181, 1.442695
        %v1184 = vpow.pop %v1183
        %v1185 = vmul.f32 %v1182, 1.442695
        %v1186 = vpow.pop %v1185
        %v1187 = vsel %vm453, %v1184, 0.0
        %1188 = vadd.xlane.f32.xlu0 %v1187
        %v1189 = vpop.xlane.xlu0 %1188
        %v1190 = vsel %vm453, %v1186, 0.0
        %1191 = vadd.xlane.f32.xlu0 %v1190
        %v1192 = vpop.xlane.xlu0 %1191
        %v1193 = vrcp.pop %v1189
        %v1194 = vmul.f32 %v1189, %v1193
        %v1195 = vsub.f32 1.0, %v1194
        %v1196 = vmul.f32 %v1193, %v1195
        %v1197 = vadd.f32 %v1193, %v1196
        %vm1198 = vweird.f32 %v1189
        %vm1199 = vweird.f32 %v1193
        %vm1200 = vmor %vm1198, %vm1199
        %v1201 = vsel %vm1200, %v1193, %v1197
        %v1202 = vand.u32 2147483647, %v1189
        %vm1203 = vcmp.eq.f32.partialorder %v1202, 8.507059e+37
        %v1204 = vand.u32 %v1189, 2147483648
        %v1205 = vor.u32 1.1754944e-38, %v1204
        %v1206 = vsel %vm1203, %v1205, %v1201
        %v1207 = vmul.f32 %v1184, %v1206
        %v1208 = vrcp.pop %v1192
        %v1209 = vmul.f32 %v1192, %v1208
        %v1210 = vsub.f32 1.0, %v1209
        %v1211 = vmul.f32 %v1208, %v1210
        %v1212 = vadd.f32 %v1208, %v1211
        %vm1213 = vweird.f32 %v1192
        %vm1214 = vweird.f32 %v1208
        %vm1215 = vmor %vm1213, %vm1214
        %v1216 = vsel %vm1215, %v1208, %v1212
        %v1217 = vand.u32 2147483647, %v1192
        %vm1218 = vcmp.eq.f32.partialorder %v1217, 8.507059e+37
        %v1219 = vand.u32 %v1192, 2147483648
        %v1220 = vor.u32 1.1754944e-38, %v1219
        %v1221 = vsel %vm1218, %v1220, %v1216
        %v1222 = vmul.f32 %v1186, %v1221
        %s1223 = scalar_lea.vmem [#allocation7], 112
        %v1224 = vld [vmem:[%s1223] sm:$0xff]
        %v1225 = vld [vmem:[%s1223 + $0x8] sm:$0xff]
        %v1226 = vadd.f32 %v1207, %v1224
        %v1227 = vadd.f32 %v1222, %v1225
        %v1228 = vpack.c.bf16 %v1227, %v1226
        %1229 = vrot.lane.b32.xlu0 %v452, 16
        %v1230 = vpop.permute.xlu0 %1229
        %v1233 = vsel %vm453, %v1228, 0
        %1235 = vmatpush.bf16.msra.mxu0 0
        %1236 = vmatpush.bf16.msra.mxu0 0
        %1237 = vmatpush.bf16.msra.mxu0 0
        %1238 = vmatpush.bf16.msra.mxu0 0
        %1239 = vmatpush.bf16.msra.mxu0 0
        %1240 = vmatpush.bf16.msra.mxu0 0
        %1241 = vmatpush.bf16.msra.mxu0 0
        %1242 = vmatpush.bf16.msra.mxu0 %v1230
        %1243 = vmatmul.bf16.gmra.mxu0 %v1233
        %v1244 = vpop.f32.mrf.mxu0
        %v1245 = vadd.f32 0.0, %v1244
        %v1246 = vpop.f32.mrf.mxu0
        %v1247 = vadd.f32 0.0, %v1246
        %1248 = vdwg.mxu0
        %1251 = vrot.lane.b32.xlu0 %v645, 16
        %v1252 = vpop.permute.xlu0 %1251
        %1253 = vrot.lane.b32.xlu0 %v647, 16
        %v1254 = vpop.permute.xlu0 %1253
        %1259 = vrot.lane.b32.xlu0 %v745, 32
        %v1260 = vpop.permute.xlu0 %1259
        %1261 = vrot.lane.b32.xlu0 %v747, 32
        %v1262 = vpop.permute.xlu0 %1261
        %1267 = vrot.lane.b32.xlu0 %v845, 48
        %v1268 = vpop.permute.xlu0 %1267
        %1269 = vrot.lane.b32.xlu0 %v847, 48
        %v1270 = vpop.permute.xlu0 %1269
        %1275 = vrot.lane.b32.xlu0 %v945, 64
        %v1276 = vpop.permute.xlu0 %1275
        %1277 = vrot.lane.b32.xlu0 %v947, 64
        %v1278 = vpop.permute.xlu0 %1277
        %1283 = vrot.lane.b32.xlu0 %v1045, 80
        %v1284 = vpop.permute.xlu0 %1283
        %1285 = vrot.lane.b32.xlu0 %v1047, 80
        %v1286 = vpop.permute.xlu0 %1285
        %1291 = vrot.lane.b32.xlu0 %v1145, 96
        %v1292 = vpop.permute.xlu0 %1291
        %1293 = vrot.lane.b32.xlu0 %v1147, 96
        %v1294 = vpop.permute.xlu0 %1293
        %1299 = vrot.lane.b32.xlu0 %v1245, 112
        %v1300 = vpop.permute.xlu0 %1299
        %1301 = vrot.lane.b32.xlu0 %v1247, 112
        %v1302 = vpop.permute.xlu0 %1301
        %v1305 = vsel %vm453, %v542, %v1252
        %v1306 = vsel %vm453, %v544, %v1254
        %vm1307 = vcmask 261120
        %v1308 = vsel %vm1307, %v1305, %v1260
        %v1309 = vsel %vm1307, %v1306, %v1262
        %vm1310 = vcmask 392192
        %v1311 = vsel %vm1310, %v1308, %v1268
        %v1312 = vsel %vm1310, %v1309, %v1270
        %vm1313 = vcmask 523264
        %v1314 = vsel %vm1313, %v1311, %v1276
        %v1315 = vsel %vm1313, %v1312, %v1278
        %vm1316 = vcmask 654336
        %v1317 = vsel %vm1316, %v1314, %v1284
        %v1318 = vsel %vm1316, %v1315, %v1286
        %vm1319 = vcmask 785408
        %v1320 = vsel %vm1319, %v1317, %v1292
        %v1321 = vsel %vm1319, %v1318, %v1294
        %vm1322 = vcmask 916480
        %v1323 = vsel %vm1322, %v1320, %v1300
        %v1324 = vsel %vm1322, %v1321, %v1302
        %1325 = vadd.xlane.f32.xlu0 %v1323
        %v1326 = vpop.xlane.xlu0 %1325
        %1327 = vadd.xlane.f32.xlu0 %v1324
        %v1328 = vpop.xlane.xlu0 %1327
        %v1329 = vrcp.pop 128.0
        %v1330 = vmul.f32 128.0, %v1329
        %v1331 = vsub.f32 1.0, %v1330
        %v1332 = vmul.f32 %v1329, %v1331
        %v1333 = vadd.f32 %v1329, %v1332
        %vm1334 = vweird.f32 %v1329
        %v1335 = vsel %vm1334, %v1329, %v1333
        %v1336 = vmul.f32 %v1326, %v1335
        %v1337 = vmul.f32 %v1328, %v1335
        %v1338 = vsub.f32 %v1323, %v1336
        %v1339 = vsub.f32 %v1324, %v1337
        %v1340 = vmul.f32 %v1338, %v1338
        %v1341 = vmul.f32 %v1339, %v1339
        %1342 = vadd.xlane.f32.xlu0 %v1340
        %v1343 = vpop.xlane.xlu0 %1342
        %1344 = vadd.xlane.f32.xlu0 %v1341
        %v1345 = vpop.xlane.xlu0 %1344
        %v1346 = vmul.f32 %v1343, %v1335
        %v1347 = vmul.f32 %v1345, %v1335
        %v1348 = vadd.f32 %v1346, 1e-05
        %v1349 = vadd.f32 %v1347, 1e-05
        %v1350 = vrsqrt.pop %v1348
        %v1351 = vmul.f32 %v1350, %v1348
        %v1352 = vmul.f32 %v1351, %v1350
        %v1353 = vmul.f32 0.5, %v1352
        %v1354 = vsub.f32 1.5, %v1353
        %v1355 = vmul.f32 %v1350, %v1354
        %vm1356 = vweird.f32 %v1348
        %vm1357 = vweird.f32 %v1350
        %vm1358 = vmor %vm1356, %vm1357
        %v1359 = vsel %vm1358, %v1350, %v1355
        %v1360 = vrsqrt.pop %v1349
        %v1361 = vmul.f32 %v1360, %v1349
        %v1362 = vmul.f32 %v1361, %v1360
        %v1363 = vmul.f32 0.5, %v1362
        %v1364 = vsub.f32 1.5, %v1363
        %v1365 = vmul.f32 %v1360, %v1364
        %vm1366 = vweird.f32 %v1349
        %vm1367 = vweird.f32 %v1360
        %vm1368 = vmor %vm1366, %vm1367
        %v1369 = vsel %vm1368, %v1360, %v1365
        %v1370 = vmul.f32 %v1338, %v1359
        %v1371 = vmul.f32 %v1339, %v1369
        %v1372 = vld [vmem:[%s3] sm:$0x1]
        %v1374 = vperm.slane %v1372, 0
        %v1376 = vmul.f32 %v1370, %v1374
        %v1377 = vmul.f32 %v1371, %v1374
        %v1378 = vld [vmem:[%s4] sm:$0x1]
        %v1380 = vperm.slane %v1378, 0
        %v1382 = vadd.f32 %v1376, %v1380
        %v1383 = vadd.f32 %v1377, %v1380
        %v1384 = vadd.f32 %v333, %v1382
        %v1385 = vadd.f32 %v334, %v1383
        %1386 = vadd.xlane.f32.xlu0 %v1384
        %v1387 = vpop.xlane.xlu0 %1386
        %1388 = vadd.xlane.f32.xlu0 %v1385
        %v1389 = vpop.xlane.xlu0 %1388
        %v1390 = vmul.f32 %v1387, %v1335
        %v1391 = vmul.f32 %v1389, %v1335
        %v1392 = vsub.f32 %v1384, %v1390
        %v1393 = vsub.f32 %v1385, %v1391
        %v1394 = vmul.f32 %v1392, %v1392
        %v1395 = vmul.f32 %v1393, %v1393
        %1396 = vadd.xlane.f32.xlu0 %v1394
        %v1397 = vpop.xlane.xlu0 %1396
        %1398 = vadd.xlane.f32.xlu0 %v1395
        %v1399 = vpop.xlane.xlu0 %1398
        %v1400 = vmul.f32 %v1397, %v1335
        %v1401 = vmul.f32 %v1399, %v1335
        %v1402 = vadd.f32 %v1400, 1e-05
        %v1403 = vadd.f32 %v1401, 1e-05
        %v1404 = vrsqrt.pop %v1402
        %v1405 = vmul.f32 %v1404, %v1402
        %v1406 = vmul.f32 %v1405, %v1404
        %v1407 = vmul.f32 0.5, %v1406
        %v1408 = vsub.f32 1.5, %v1407
        %v1409 = vmul.f32 %v1404, %v1408
        %vm1410 = vweird.f32 %v1402
        %vm1411 = vweird.f32 %v1404
        %vm1412 = vmor %vm1410, %vm1411
        %v1413 = vsel %vm1412, %v1404, %v1409
        %v1414 = vrsqrt.pop %v1403
        %v1415 = vmul.f32 %v1414, %v1403
        %v1416 = vmul.f32 %v1415, %v1414
        %v1417 = vmul.f32 0.5, %v1416
        %v1418 = vsub.f32 1.5, %v1417
        %v1419 = vmul.f32 %v1414, %v1418
        %vm1420 = vweird.f32 %v1403
        %vm1421 = vweird.f32 %v1414
        %vm1422 = vmor %vm1420, %vm1421
        %v1423 = vsel %vm1422, %v1414, %v1419
        %v1424 = vmul.f32 %v1392, %v1413
        %v1425 = vmul.f32 %v1393, %v1423
        %v1426 = vld [vmem:[%s5] sm:$0x1]
        %v1428 = vperm.slane %v1426, 0
        %v1430 = vmul.f32 %v1424, %v1428
        %v1431 = vmul.f32 %v1425, %v1428
        %v1432 = vld [vmem:[%s6] sm:$0x1]
        %v1434 = vperm.slane %v1432, 0
        %v1436 = vadd.f32 %v1430, %v1434
        %v1437 = vadd.f32 %v1431, %v1434
        %1438 = vst [vmem:[%s331] sm:$0xff] %v1436
        %1439 = vst [vmem:[%s331 + $0x8] sm:$0xff] %v1437
        %s1440 = sand.u32 %s185, 1
        %s1441 = scalar_lea.sflag [#allocation4], %s1440
        %s1442 = sand.u32 %s185, 1
        %s1443 = smul.addr %s1442, 16
        %s1444 = scalar_lea.vmem [#allocation8], %s1443
        // Predicated region
        $region61: #{tpu_custom_call.1} parent=47 // pred_check
          %p1445 = pneg %p195
        $region62: #{tpu_custom_call.1} parent=47 // pred_check_branch
          %1447 = sbr.rel (%p1445) target = $region64
        $region63: #{tpu_custom_call.1} parent=47 // pred_region
          %1449 = vsyncadd %s1441, 0
          %s1450 = smul.addr %s25, 2
          %s1451 = smul.addr %s1450, 8
          %s1452 = scalar_lea.hbm %s7, %s1451
          %s1453 = sshll.u32 %s1444, 4
          %s1454 = int_to_ptr.vmem [resolvable:$true] %s1453
          %s1455 = sshll.u32 %s1452, 4
          %s1456 = int_to_ptr.hbm [resolvable:$true] %s1455
          %1461 = dma.vmem_to_hbm [thread:$0]  %s1454, 256, %s1456, %s1441, 128, 128, 8
        $region64: #{tpu_custom_call.1} parent=47 // pred_fallthru
          _
      $region48: #{tpu_custom_call.1} parent=5 // pred_fallthru
        _
      %p1462 = scmp.le.s32.totalorder 2, %s20
      // Predicated region
      $region65: #{tpu_custom_call.1} parent=5 // pred_check
        %p1463 = pneg %p1462
      $region66: #{tpu_custom_call.1} parent=5 // pred_check_branch
        %1465 = sbr.rel (%p1463) target = $region68
      $region67: #{tpu_custom_call.1} parent=5 // pred_region
        %s1466 = ssub.s32 %s20, 2
        // Predicated region
        $region69: #{tpu_custom_call.1} parent=67 // pred_check
          %p1467 = pneg %p201
        $region70: #{tpu_custom_call.1} parent=67 // pred_check_branch
          %1469 = sbr.rel (%p1467) target = $region72
        $region71: #{tpu_custom_call.1} parent=67 // pred_region
          %s1470 = sand.u32 %s186, 1
          %s1471 = scalar_lea.sflag [#allocation4], %s1470
          %s1472 = sand.u32 %s186, 1
          %s1473 = smul.addr %s1472, 16
          %s1474 = scalar_lea.vmem [#allocation8], %s1473
          %1476 = dma.done %s1471, 256
        $region72: #{tpu_custom_call.1} parent=67 // pred_fallthru
          _
      $region68: #{tpu_custom_call.1} parent=5 // pred_fallthru
        _
    $region6: #{tpu_custom_call.1} parent=1 // loop_footer
      %s24 = sadd.s32 1, %s20
    $region7: #{tpu_custom_call.1} parent=1 // loop_footer_branch
      %19 = sbr.rel target = $region3
    $region8: #{tpu_custom_call.1} parent=1 // loop_exit
      _
    %1477 = vsyncpa [#allocation3], 1
    %s1478 = scalar_lea.sflag [#allocation3], 1
    %1479 = vsyncpa %s1478, 1
    %1480 = vsyncpa [#allocation6], 1
    %1481 = vsyncpa [#allocation4], 1
    %s1482 = scalar_lea.sflag [#allocation4], 1
    %1483 = vsyncpa %s1482, 1

</llo_original>
